<compile_context>
chip_gen: v7x
topology: tpu7x:2x2x1
jax: 0.10.0
libtpu: 0.0.40
codegen_flags: <defaults>
</compile_context>

<pallas_src>
import functools

import jax
import jax.numpy as jnp
from jax import lax
from jax.experimental import pallas as pl
from jax.experimental.pallas import tpu as pltpu


_LANE = 128
_VMEM_SPEC = pl.BlockSpec(memory_space=pltpu.MemorySpace.VMEM)
_SMEM_SPEC = pl.BlockSpec(memory_space=pltpu.MemorySpace.SMEM)


# ---------------------------------------------------------------------------
# Kernel bodies
# ---------------------------------------------------------------------------
def _encode_tokens(ids_ref, emb_ref, w_t_ref, b_ref, gath_ref, *, n_seq, seq_len):
    """Embedding gather -> linear(+bias) -> max-pool.  Returns (n_seq, H_out)."""
    n_tok = n_seq * seq_len
    # Embedding row gather (replaces the one-hot x table matmul). ids are SMEM
    # scalars; each read is a dynamic-sublane-start load of one table row.
    for t in range(n_tok):                          # static unrolled; n_tok small
        idx = ids_ref[t]
        gath_ref[pl.ds(t, 1), :] = emb_ref[pl.ds(idx, 1), :]
    x = gath_ref[...]                               # (n_tok, H_in) f32

    # Linear layer on the MXU (weight pre-transposed in the wrapper: (H_in, H_out)).
    y = jnp.dot(x, w_t_ref[...], preferred_element_type=jnp.float32) + b_ref[...]

    # max_pool1d over the sequence axis: per-sequence sublane reduction.
    pooled = [jnp.max(y[s * seq_len:(s + 1) * seq_len, :], axis=0, keepdims=True)
              for s in range(n_seq)]
    return jnp.concatenate(pooled, axis=0)          # (n_seq, H_out)


def encoder_kernel(ids_ref, emb_ref, w_t_ref, b_ref, out_ref, gath_ref, *,
                   n_seq, seq_len):
    """Encoder-only path: lane-dense (Bp, Hp) output (wrapper slices to (B, H))."""
    out_ref[...] = _encode_tokens(ids_ref, emb_ref, w_t_ref, b_ref, gath_ref,
                                  n_seq=n_seq, seq_len=seq_len)


def triplet_kernel(ids_ref, emb_ref, w_t_ref, b_ref, loss_ref, gath_ref, *,
                   batch, n_seq, seq_len, margin):
    """Stacked [anchor; positive; negative] encode + cosine triplet loss."""
    enc = _encode_tokens(ids_ref, emb_ref, w_t_ref, b_ref, gath_ref,
                         n_seq=n_seq, seq_len=seq_len)        # (n_seq, H)
    a = enc[:batch]
    p = enc[batch:2 * batch]
    n = enc[2 * batch:3 * batch]

    eps = 1e-12  # F.normalize default: per-vector norm clamped at eps

    def inv_norm(t):
        # 1 / max(||t||, eps) == rsqrt(max(||t||^2, eps^2)); EUP rsqrt.
        return lax.rsqrt(jnp.maximum(jnp.sum(t * t, axis=-1, keepdims=True),
                                     eps * eps))

    inv_a, inv_p, inv_n = inv_norm(a), inv_norm(p), inv_norm(n)
    cos_ap = jnp.sum(a * p, axis=-1, keepdims=True) * (inv_a * inv_p)
    cos_an = jnp.sum(a * n, axis=-1, keepdims=True) * (inv_a * inv_n)

    # (1 - cos_ap) - (1 - cos_an) + margin
    diff = cos_an - cos_ap + margin                           # (B, 1)
    mask = diff > 0.0                                         # torch diff.gt(0)
    cnt = jnp.sum(mask.astype(jnp.float32))
    total = jnp.sum(jnp.where(mask, diff, 0.0))
    # torch.mean of an empty selection is nan; 0/0 reproduces that.
    loss_ref[0] = total / cnt


# ---------------------------------------------------------------------------
# Wrappers
# ---------------------------------------------------------------------------
def _pad_rows(a, multiple):
    pad = (-a.shape[0]) % multiple
    if pad == 0:
        return a
    return jnp.pad(a, ((0, pad),) + ((0, 0),) * (a.ndim - 1))


def encode(params, ids):
    """SentenceEncoder.forward(ids) -> (B, H)."""
    B, S = ids.shape
    H = params["embedding"].shape[1]
    Hp = max(_LANE, ((H + _LANE - 1) // _LANE) * _LANE)       # lane-dense output

    emb = _pad_rows(params["embedding"].astype(jnp.float32), 8)           # (Vp, H)
    w_t = jnp.zeros((H, Hp), jnp.float32).at[:, :H].set(
        params["weight"].astype(jnp.float32).T)                           # (H, Hp)
    b = jnp.zeros((1, Hp), jnp.float32).at[:, :H].set(
        params["bias"].astype(jnp.float32).reshape(1, H))                 # (1, Hp)

    ids_p = _pad_rows(ids.astype(jnp.int32), 8)                           # (Bp, S)
    Bp = ids_p.shape[0]

    kernel = functools.partial(encoder_kernel, n_seq=Bp, seq_len=S)
    out = pl.pallas_call(
        kernel,
        out_shape=jax.ShapeDtypeStruct((Bp, Hp), jnp.float32),
        in_specs=[_SMEM_SPEC, _VMEM_SPEC, _VMEM_SPEC, _VMEM_SPEC],
        out_specs=_VMEM_SPEC,
        scratch_shapes=[pltpu.VMEM((Bp * S, H), jnp.float32)],
    )(ids_p.reshape(-1), emb, w_t, b)
    return out[:B, :H]


def triplet_loss(params, anchor, positive, negative, margin):
    """Fused encode(anchor|positive|negative) + cosine triplet loss -> scalar."""
    B, S = anchor.shape
    H = params["embedding"].shape[1]

    emb = _pad_rows(params["embedding"].astype(jnp.float32), 8)           # (Vp, H)
    w_t = params["weight"].astype(jnp.float32).T                          # (H, H)
    b = params["bias"].astype(jnp.float32).reshape(1, H)                  # (1, H)

    ids = jnp.concatenate([anchor, positive, negative], axis=0).astype(jnp.int32)
    ids_p = _pad_rows(ids, 8)                                             # (Np, S)
    Np = ids_p.shape[0]

    kernel = functools.partial(triplet_kernel, batch=B, n_seq=Np, seq_len=S,
                               margin=float(margin))
    loss = pl.pallas_call(
        kernel,
        out_shape=jax.ShapeDtypeStruct((1,), jnp.float32),
        in_specs=[_SMEM_SPEC, _VMEM_SPEC, _VMEM_SPEC, _VMEM_SPEC],
        out_specs=_SMEM_SPEC,
        scratch_shapes=[pltpu.VMEM((Np * S, H), jnp.float32)],
    )(ids_p.reshape(-1), emb, w_t, b)
    return loss[0]


def siamese_forward(params, anchor, positive=None, negative=None, margin=None):
    """Mirrors SiameseNetwork.forward."""
    if positive is not None and negative is not None:
        m = 0.1 if margin is None else margin
        return triplet_loss(params, anchor, positive, negative, m)
    return encode(params, anchor)


def init_params(key, vocab_size, hidden_size):
    """Deterministic synthetic parameters (shapes follow the module __init__)."""
    V = vocab_size + 1
    k_emb, k_w, k_b = jax.random.split(key, 3)
    emb = jax.random.normal(k_emb, (V, hidden_size), jnp.float32) * 0.1
    emb = emb.at[0].set(0.0)  # padding_idx=0
    w = jax.random.normal(k_w, (hidden_size, hidden_size), jnp.float32) * 0.1
    b = jax.random.normal(k_b, (hidden_size,), jnp.float32) * 0.1
    return {"embedding": emb, "weight": w, "bias": b}


# ---------------------------------------------------------------------------
# Main
# ---------------------------------------------------------------------------
if __name__ == "__main__":
    config = {"hidden_size": 32, "vocab_size": 30, "max_length": 8}
    batch, seq_len = 4, config["max_length"]

    key = jax.random.PRNGKey(0)
    k_params, k_a, k_p, k_n = jax.random.split(key, 4)

    params = init_params(k_params, config["vocab_size"], config["hidden_size"])

    vocab_plus_1 = config["vocab_size"] + 1
    anchor = jax.random.randint(k_a, (batch, seq_len), 0, vocab_plus_1, jnp.int32)
    positive = jax.random.randint(k_p, (batch, seq_len), 0, vocab_plus_1, jnp.int32)
    negative = jax.random.randint(k_n, (batch, seq_len), 0, vocab_plus_1, jnp.int32)

    # Triplet-loss path (single fused pallas_call: gather + linear + pool + loss).
    loss = siamese_forward(params, anchor, positive, negative)
    loss = jax.block_until_ready(loss)

    # Encoder-only path (positive/negative omitted).
    enc = siamese_forward(params, anchor)
    enc = jax.block_until_ready(enc)

    assert enc.shape == (batch, config["hidden_size"])
    assert loss.shape == ()

    print("KERNEL_OK")
</pallas_src>

<mosaic_0001>
module attributes {stable_mosaic.version = 11 : i64} {
  func.func @triplet_kernel(%arg0: memref<128xi32, #tpu.memory_space<smem>>, %arg1: memref<32x32xf32, #tpu.memory_space<vmem>>, %arg2: memref<32x32xf32, #tpu.memory_space<vmem>>, %arg3: memref<1x32xf32, #tpu.memory_space<vmem>>, %arg4: memref<1xf32, #tpu.memory_space<smem>>, %arg5: memref<128x32xf32, #tpu.memory_space<vmem>>) attributes {dimension_semantics = [], scalar_prefetch = 0 : i64, scratch_operands = 1 : i64, tpu.core_type = #tpu.core_type<tc>} {
    %c0 = arith.constant 0 : index
    %0 = memref.load %arg0[%c0] : memref<128xi32, #tpu.memory_space<smem>>
    %1 = arith.index_cast %0 : i32 to index
    %c0_0 = arith.constant 0 : index
    %2 = vector.load %arg1[%1, %c0_0] : memref<32x32xf32, #tpu.memory_space<vmem>>, vector<1x32xf32>
    %c0_1 = arith.constant 0 : index
    %c0_2 = arith.constant 0 : index
    %3 = vector.load %arg5[%c0_1, %c0_2] : memref<128x32xf32, #tpu.memory_space<vmem>>, vector<1x32xf32>
    tpu.vector_store %arg5[%c0_1, %c0_2], %2 {strides = array<i32>} : memref<128x32xf32, #tpu.memory_space<vmem>>, vector<1x32xf32>,
    %c1 = arith.constant 1 : index
    %4 = memref.load %arg0[%c1] : memref<128xi32, #tpu.memory_space<smem>>
    %5 = arith.index_cast %4 : i32 to index
    %c0_3 = arith.constant 0 : index
    %6 = vector.load %arg1[%5, %c0_3] : memref<32x32xf32, #tpu.memory_space<vmem>>, vector<1x32xf32>
    %c1_4 = arith.constant 1 : index
    %c0_5 = arith.constant 0 : index
    %7 = vector.load %arg5[%c1_4, %c0_5] : memref<128x32xf32, #tpu.memory_space<vmem>>, vector<1x32xf32>
    tpu.vector_store %arg5[%c1_4, %c0_5], %6 {strides = array<i32>} : memref<128x32xf32, #tpu.memory_space<vmem>>, vector<1x32xf32>,
    %c2 = arith.constant 2 : index
    %8 = memref.load %arg0[%c2] : memref<128xi32, #tpu.memory_space<smem>>
    %9 = arith.index_cast %8 : i32 to index
    %c0_6 = arith.constant 0 : index
    %10 = vector.load %arg1[%9, %c0_6] : memref<32x32xf32, #tpu.memory_space<vmem>>, vector<1x32xf32>
    %c2_7 = arith.constant 2 : index
    %c0_8 = arith.constant 0 : index
    %11 = vector.load %arg5[%c2_7, %c0_8] : memref<128x32xf32, #tpu.memory_space<vmem>>, vector<1x32xf32>
    tpu.vector_store %arg5[%c2_7, %c0_8], %10 {strides = array<i32>} : memref<128x32xf32, #tpu.memory_space<vmem>>, vector<1x32xf32>,
    %c3 = arith.constant 3 : index
    %12 = memref.load %arg0[%c3] : memref<128xi32, #tpu.memory_space<smem>>
    %13 = arith.index_cast %12 : i32 to index
    %c0_9 = arith.constant 0 : index
    %14 = vector.load %arg1[%13, %c0_9] : memref<32x32xf32, #tpu.memory_space<vmem>>, vector<1x32xf32>
    %c3_10 = arith.constant 3 : index
    %c0_11 = arith.constant 0 : index
    %15 = vector.load %arg5[%c3_10, %c0_11] : memref<128x32xf32, #tpu.memory_space<vmem>>, vector<1x32xf32>
    tpu.vector_store %arg5[%c3_10, %c0_11], %14 {strides = array<i32>} : memref<128x32xf32, #tpu.memory_space<vmem>>, vector<1x32xf32>,
    %c4 = arith.constant 4 : index
    %16 = memref.load %arg0[%c4] : memref<128xi32, #tpu.memory_space<smem>>
    %17 = arith.index_cast %16 : i32 to index
    %c0_12 = arith.constant 0 : index
    %18 = vector.load %arg1[%17, %c0_12] : memref<32x32xf32, #tpu.memory_space<vmem>>, vector<1x32xf32>
    %c4_13 = arith.constant 4 : index
    %c0_14 = arith.constant 0 : index
    %19 = vector.load %arg5[%c4_13, %c0_14] : memref<128x32xf32, #tpu.memory_space<vmem>>, vector<1x32xf32>
    tpu.vector_store %arg5[%c4_13, %c0_14], %18 {strides = array<i32>} : memref<128x32xf32, #tpu.memory_space<vmem>>, vector<1x32xf32>,
    %c5 = arith.constant 5 : index
    %20 = memref.load %arg0[%c5] : memref<128xi32, #tpu.memory_space<smem>>
    %21 = arith.index_cast %20 : i32 to index
    %c0_15 = arith.constant 0 : index
    %22 = vector.load %arg1[%21, %c0_15] : memref<32x32xf32, #tpu.memory_space<vmem>>, vector<1x32xf32>
    %c5_16 = arith.constant 5 : index
    %c0_17 = arith.constant 0 : index
    %23 = vector.load %arg5[%c5_16, %c0_17] : memref<128x32xf32, #tpu.memory_space<vmem>>, vector<1x32xf32>
    tpu.vector_store %arg5[%c5_16, %c0_17], %22 {strides = array<i32>} : memref<128x32xf32, #tpu.memory_space<vmem>>, vector<1x32xf32>,
    %c6 = arith.constant 6 : index
    %24 = memref.load %arg0[%c6] : memref<128xi32, #tpu.memory_space<smem>>
    %25 = arith.index_cast %24 : i32 to index
    %c0_18 = arith.constant 0 : index
    %26 = vector.load %arg1[%25, %c0_18] : memref<32x32xf32, #tpu.memory_space<vmem>>, vector<1x32xf32>
    %c6_19 = arith.constant 6 : index
    %c0_20 = arith.constant 0 : index
    %27 = vector.load %arg5[%c6_19, %c0_20] : memref<128x32xf32, #tpu.memory_space<vmem>>, vector<1x32xf32>
    tpu.vector_store %arg5[%c6_19, %c0_20], %26 {strides = array<i32>} : memref<128x32xf32, #tpu.memory_space<vmem>>, vector<1x32xf32>,
    %c7 = arith.constant 7 : index
    %28 = memref.load %arg0[%c7] : memref<128xi32, #tpu.memory_space<smem>>
    %29 = arith.index_cast %28 : i32 to index
    %c0_21 = arith.constant 0 : index
    %30 = vector.load %arg1[%29, %c0_21] : memref<32x32xf32, #tpu.memory_space<vmem>>, vector<1x32xf32>
    %c7_22 = arith.constant 7 : index
    %c0_23 = arith.constant 0 : index
    %31 = vector.load %arg5[%c7_22, %c0_23] : memref<128x32xf32, #tpu.memory_space<vmem>>, vector<1x32xf32>
    tpu.vector_store %arg5[%c7_22, %c0_23], %30 {strides = array<i32>} : memref<128x32xf32, #tpu.memory_space<vmem>>, vector<1x32xf32>,
    %c8 = arith.constant 8 : index
    %32 = memref.load %arg0[%c8] : memref<128xi32, #tpu.memory_space<smem>>
    %33 = arith.index_cast %32 : i32 to index
    %c0_24 = arith.constant 0 : index
    %34 = vector.load %arg1[%33, %c0_24] : memref<32x32xf32, #tpu.memory_space<vmem>>, vector<1x32xf32>
    %c8_25 = arith.constant 8 : index
    %c0_26 = arith.constant 0 : index
    %35 = vector.load %arg5[%c8_25, %c0_26] : memref<128x32xf32, #tpu.memory_space<vmem>>, vector<1x32xf32>
    tpu.vector_store %arg5[%c8_25, %c0_26], %34 {strides = array<i32>} : memref<128x32xf32, #tpu.memory_space<vmem>>, vector<1x32xf32>,
    %c9 = arith.constant 9 : index
    %36 = memref.load %arg0[%c9] : memref<128xi32, #tpu.memory_space<smem>>
    %37 = arith.index_cast %36 : i32 to index
    %c0_27 = arith.constant 0 : index
    %38 = vector.load %arg1[%37, %c0_27] : memref<32x32xf32, #tpu.memory_space<vmem>>, vector<1x32xf32>
    %c9_28 = arith.constant 9 : index
    %c0_29 = arith.constant 0 : index
    %39 = vector.load %arg5[%c9_28, %c0_29] : memref<128x32xf32, #tpu.memory_space<vmem>>, vector<1x32xf32>
    tpu.vector_store %arg5[%c9_28, %c0_29], %38 {strides = array<i32>} : memref<128x32xf32, #tpu.memory_space<vmem>>, vector<1x32xf32>,
    %c10 = arith.constant 10 : index
    %40 = memref.load %arg0[%c10] : memref<128xi32, #tpu.memory_space<smem>>
    %41 = arith.index_cast %40 : i32 to index
    %c0_30 = arith.constant 0 : index
    %42 = vector.load %arg1[%41, %c0_30] : memref<32x32xf32, #tpu.memory_space<vmem>>, vector<1x32xf32>
    %c10_31 = arith.constant 10 : index
    %c0_32 = arith.constant 0 : index
    %43 = vector.load %arg5[%c10_31, %c0_32] : memref<128x32xf32, #tpu.memory_space<vmem>>, vector<1x32xf32>
    tpu.vector_store %arg5[%c10_31, %c0_32], %42 {strides = array<i32>} : memref<128x32xf32, #tpu.memory_space<vmem>>, vector<1x32xf32>,
    %c11 = arith.constant 11 : index
    %44 = memref.load %arg0[%c11] : memref<128xi32, #tpu.memory_space<smem>>
    %45 = arith.index_cast %44 : i32 to index
    %c0_33 = arith.constant 0 : index
    %46 = vector.load %arg1[%45, %c0_33] : memref<32x32xf32, #tpu.memory_space<vmem>>, vector<1x32xf32>
    %c11_34 = arith.constant 11 : index
    %c0_35 = arith.constant 0 : index
    %47 = vector.load %arg5[%c11_34, %c0_35] : memref<128x32xf32, #tpu.memory_space<vmem>>, vector<1x32xf32>
    tpu.vector_store %arg5[%c11_34, %c0_35], %46 {strides = array<i32>} : memref<128x32xf32, #tpu.memory_space<vmem>>, vector<1x32xf32>,
    %c12 = arith.constant 12 : index
    %48 = memref.load %arg0[%c12] : memref<128xi32, #tpu.memory_space<smem>>
    %49 = arith.index_cast %48 : i32 to index
    %c0_36 = arith.constant 0 : index
    %50 = vector.load %arg1[%49, %c0_36] : memref<32x32xf32, #tpu.memory_space<vmem>>, vector<1x32xf32>
    %c12_37 = arith.constant 12 : index
    %c0_38 = arith.constant 0 : index
    %51 = vector.load %arg5[%c12_37, %c0_38] : memref<128x32xf32, #tpu.memory_space<vmem>>, vector<1x32xf32>
    tpu.vector_store %arg5[%c12_37, %c0_38], %50 {strides = array<i32>} : memref<128x32xf32, #tpu.memory_space<vmem>>, vector<1x32xf32>,
    %c13 = arith.constant 13 : index
    %52 = memref.load %arg0[%c13] : memref<128xi32, #tpu.memory_space<smem>>
    %53 = arith.index_cast %52 : i32 to index
    %c0_39 = arith.constant 0 : index
    %54 = vector.load %arg1[%53, %c0_39] : memref<32x32xf32, #tpu.memory_space<vmem>>, vector<1x32xf32>
    %c13_40 = arith.constant 13 : index
    %c0_41 = arith.constant 0 : index
    %55 = vector.load %arg5[%c13_40, %c0_41] : memref<128x32xf32, #tpu.memory_space<vmem>>, vector<1x32xf32>
    tpu.vector_store %arg5[%c13_40, %c0_41], %54 {strides = array<i32>} : memref<128x32xf32, #tpu.memory_space<vmem>>, vector<1x32xf32>,
    %c14 = arith.constant 14 : index
    %56 = memref.load %arg0[%c14] : memref<128xi32, #tpu.memory_space<smem>>
    %57 = arith.index_cast %56 : i32 to index
    %c0_42 = arith.constant 0 : index
    %58 = vector.load %arg1[%57, %c0_42] : memref<32x32xf32, #tpu.memory_space<vmem>>, vector<1x32xf32>
    %c14_43 = arith.constant 14 : index
    %c0_44 = arith.constant 0 : index
    %59 = vector.load %arg5[%c14_43, %c0_44] : memref<128x32xf32, #tpu.memory_space<vmem>>, vector<1x32xf32>
    tpu.vector_store %arg5[%c14_43, %c0_44], %58 {strides = array<i32>} : memref<128x32xf32, #tpu.memory_space<vmem>>, vector<1x32xf32>,
    %c15 = arith.constant 15 : index
    %60 = memref.load %arg0[%c15] : memref<128xi32, #tpu.memory_space<smem>>
    %61 = arith.index_cast %60 : i32 to index
    %c0_45 = arith.constant 0 : index
    %62 = vector.load %arg1[%61, %c0_45] : memref<32x32xf32, #tpu.memory_space<vmem>>, vector<1x32xf32>
    %c15_46 = arith.constant 15 : index
    %c0_47 = arith.constant 0 : index
    %63 = vector.load %arg5[%c15_46, %c0_47] : memref<128x32xf32, #tpu.memory_space<vmem>>, vector<1x32xf32>
    tpu.vector_store %arg5[%c15_46, %c0_47], %62 {strides = array<i32>} : memref<128x32xf32, #tpu.memory_space<vmem>>, vector<1x32xf32>,
    %c16 = arith.constant 16 : index
    %64 = memref.load %arg0[%c16] : memref<128xi32, #tpu.memory_space<smem>>
    %65 = arith.index_cast %64 : i32 to index
    %c0_48 = arith.constant 0 : index
    %66 = vector.load %arg1[%65, %c0_48] : memref<32x32xf32, #tpu.memory_space<vmem>>, vector<1x32xf32>
    %c16_49 = arith.constant 16 : index
    %c0_50 = arith.constant 0 : index
    %67 = vector.load %arg5[%c16_49, %c0_50] : memref<128x32xf32, #tpu.memory_space<vmem>>, vector<1x32xf32>
    tpu.vector_store %arg5[%c16_49, %c0_50], %66 {strides = array<i32>} : memref<128x32xf32, #tpu.memory_space<vmem>>, vector<1x32xf32>,
    %c17 = arith.constant 17 : index
    %68 = memref.load %arg0[%c17] : memref<128xi32, #tpu.memory_space<smem>>
    %69 = arith.index_cast %68 : i32 to index
    %c0_51 = arith.constant 0 : index
    %70 = vector.load %arg1[%69, %c0_51] : memref<32x32xf32, #tpu.memory_space<vmem>>, vector<1x32xf32>
    %c17_52 = arith.constant 17 : index
    %c0_53 = arith.constant 0 : index
    %71 = vector.load %arg5[%c17_52, %c0_53] : memref<128x32xf32, #tpu.memory_space<vmem>>, vector<1x32xf32>
    tpu.vector_store %arg5[%c17_52, %c0_53], %70 {strides = array<i32>} : memref<128x32xf32, #tpu.memory_space<vmem>>, vector<1x32xf32>,
    %c18 = arith.constant 18 : index
    %72 = memref.load %arg0[%c18] : memref<128xi32, #tpu.memory_space<smem>>
    %73 = arith.index_cast %72 : i32 to index
    %c0_54 = arith.constant 0 : index
    %74 = vector.load %arg1[%73, %c0_54] : memref<32x32xf32, #tpu.memory_space<vmem>>, vector<1x32xf32>
    %c18_55 = arith.constant 18 : index
    %c0_56 = arith.constant 0 : index
    %75 = vector.load %arg5[%c18_55, %c0_56] : memref<128x32xf32, #tpu.memory_space<vmem>>, vector<1x32xf32>
    tpu.vector_store %arg5[%c18_55, %c0_56], %74 {strides = array<i32>} : memref<128x32xf32, #tpu.memory_space<vmem>>, vector<1x32xf32>,
    %c19 = arith.constant 19 : index
    %76 = memref.load %arg0[%c19] : memref<128xi32, #tpu.memory_space<smem>>
    %77 = arith.index_cast %76 : i32 to index
    %c0_57 = arith.constant 0 : index
    %78 = vector.load %arg1[%77, %c0_57] : memref<32x32xf32, #tpu.memory_space<vmem>>, vector<1x32xf32>
    %c19_58 = arith.constant 19 : index
    %c0_59 = arith.constant 0 : index
    %79 = vector.load %arg5[%c19_58, %c0_59] : memref<128x32xf32, #tpu.memory_space<vmem>>, vector<1x32xf32>
    tpu.vector_store %arg5[%c19_58, %c0_59], %78 {strides = array<i32>} : memref<128x32xf32, #tpu.memory_space<vmem>>, vector<1x32xf32>,
    %c20 = arith.constant 20 : index
    %80 = memref.load %arg0[%c20] : memref<128xi32, #tpu.memory_space<smem>>
    %81 = arith.index_cast %80 : i32 to index
    %c0_60 = arith.constant 0 : index
    %82 = vector.load %arg1[%81, %c0_60] : memref<32x32xf32, #tpu.memory_space<vmem>>, vector<1x32xf32>
    %c20_61 = arith.constant 20 : index
    %c0_62 = arith.constant 0 : index
    %83 = vector.load %arg5[%c20_61, %c0_62] : memref<128x32xf32, #tpu.memory_space<vmem>>, vector<1x32xf32>
    tpu.vector_store %arg5[%c20_61, %c0_62], %82 {strides = array<i32>} : memref<128x32xf32, #tpu.memory_space<vmem>>, vector<1x32xf32>,
    %c21 = arith.constant 21 : index
    %84 = memref.load %arg0[%c21] : memref<128xi32, #tpu.memory_space<smem>>
    %85 = arith.index_cast %84 : i32 to index
    %c0_63 = arith.constant 0 : index
    %86 = vector.load %arg1[%85, %c0_63] : memref<32x32xf32, #tpu.memory_space<vmem>>, vector<1x32xf32>
    %c21_64 = arith.constant 21 : index
    %c0_65 = arith.constant 0 : index
    %87 = vector.load %arg5[%c21_64, %c0_65] : memref<128x32xf32, #tpu.memory_space<vmem>>, vector<1x32xf32>
    tpu.vector_store %arg5[%c21_64, %c0_65], %86 {strides = array<i32>} : memref<128x32xf32, #tpu.memory_space<vmem>>, vector<1x32xf32>,
    %c22 = arith.constant 22 : index
    %88 = memref.load %arg0[%c22] : memref<128xi32, #tpu.memory_space<smem>>
    %89 = arith.index_cast %88 : i32 to index
    %c0_66 = arith.constant 0 : index
    %90 = vector.load %arg1[%89, %c0_66] : memref<32x32xf32, #tpu.memory_space<vmem>>, vector<1x32xf32>
    %c22_67 = arith.constant 22 : index
    %c0_68 = arith.constant 0 : index
    %91 = vector.load %arg5[%c22_67, %c0_68] : memref<128x32xf32, #tpu.memory_space<vmem>>, vector<1x32xf32>
    tpu.vector_store %arg5[%c22_67, %c0_68], %90 {strides = array<i32>} : memref<128x32xf32, #tpu.memory_space<vmem>>, vector<1x32xf32>,
    %c23 = arith.constant 23 : index
    %92 = memref.load %arg0[%c23] : memref<128xi32, #tpu.memory_space<smem>>
    %93 = arith.index_cast %92 : i32 to index
    %c0_69 = arith.constant 0 : index
    %94 = vector.load %arg1[%93, %c0_69] : memref<32x32xf32, #tpu.memory_space<vmem>>, vector<1x32xf32>
    %c23_70 = arith.constant 23 : index
    %c0_71 = arith.constant 0 : index
    %95 = vector.load %arg5[%c23_70, %c0_71] : memref<128x32xf32, #tpu.memory_space<vmem>>, vector<1x32xf32>
    tpu.vector_store %arg5[%c23_70, %c0_71], %94 {strides = array<i32>} : memref<128x32xf32, #tpu.memory_space<vmem>>, vector<1x32xf32>,
    %c24 = arith.constant 24 : index
    %96 = memref.load %arg0[%c24] : memref<128xi32, #tpu.memory_space<smem>>
    %97 = arith.index_cast %96 : i32 to index
    %c0_72 = arith.constant 0 : index
    %98 = vector.load %arg1[%97, %c0_72] : memref<32x32xf32, #tpu.memory_space<vmem>>, vector<1x32xf32>
    %c24_73 = arith.constant 24 : index
    %c0_74 = arith.constant 0 : index
    %99 = vector.load %arg5[%c24_73, %c0_74] : memref<128x32xf32, #tpu.memory_space<vmem>>, vector<1x32xf32>
    tpu.vector_store %arg5[%c24_73, %c0_74], %98 {strides = array<i32>} : memref<128x32xf32, #tpu.memory_space<vmem>>, vector<1x32xf32>,
    %c25 = arith.constant 25 : index
    %100 = memref.load %arg0[%c25] : memref<128xi32, #tpu.memory_space<smem>>
    %101 = arith.index_cast %100 : i32 to index
    %c0_75 = arith.constant 0 : index
    %102 = vector.load %arg1[%101, %c0_75] : memref<32x32xf32, #tpu.memory_space<vmem>>, vector<1x32xf32>
    %c25_76 = arith.constant 25 : index
    %c0_77 = arith.constant 0 : index
    %103 = vector.load %arg5[%c25_76, %c0_77] : memref<128x32xf32, #tpu.memory_space<vmem>>, vector<1x32xf32>
    tpu.vector_store %arg5[%c25_76, %c0_77], %102 {strides = array<i32>} : memref<128x32xf32, #tpu.memory_space<vmem>>, vector<1x32xf32>,
    %c26 = arith.constant 26 : index
    %104 = memref.load %arg0[%c26] : memref<128xi32, #tpu.memory_space<smem>>
    %105 = arith.index_cast %104 : i32 to index
    %c0_78 = arith.constant 0 : index
    %106 = vector.load %arg1[%105, %c0_78] : memref<32x32xf32, #tpu.memory_space<vmem>>, vector<1x32xf32>
    %c26_79 = arith.constant 26 : index
    %c0_80 = arith.constant 0 : index
    %107 = vector.load %arg5[%c26_79, %c0_80] : memref<128x32xf32, #tpu.memory_space<vmem>>, vector<1x32xf32>
    tpu.vector_store %arg5[%c26_79, %c0_80], %106 {strides = array<i32>} : memref<128x32xf32, #tpu.memory_space<vmem>>, vector<1x32xf32>,
    %c27 = arith.constant 27 : index
    %108 = memref.load %arg0[%c27] : memref<128xi32, #tpu.memory_space<smem>>
    %109 = arith.index_cast %108 : i32 to index
    %c0_81 = arith.constant 0 : index
    %110 = vector.load %arg1[%109, %c0_81] : memref<32x32xf32, #tpu.memory_space<vmem>>, vector<1x32xf32>
    %c27_82 = arith.constant 27 : index
    %c0_83 = arith.constant 0 : index
    %111 = vector.load %arg5[%c27_82, %c0_83] : memref<128x32xf32, #tpu.memory_space<vmem>>, vector<1x32xf32>
    tpu.vector_store %arg5[%c27_82, %c0_83], %110 {strides = array<i32>} : memref<128x32xf32, #tpu.memory_space<vmem>>, vector<1x32xf32>,
    %c28 = arith.constant 28 : index
    %112 = memref.load %arg0[%c28] : memref<128xi32, #tpu.memory_space<smem>>
    %113 = arith.index_cast %112 : i32 to index
    %c0_84 = arith.constant 0 : index
    %114 = vector.load %arg1[%113, %c0_84] : memref<32x32xf32, #tpu.memory_space<vmem>>, vector<1x32xf32>
    %c28_85 = arith.constant 28 : index
    %c0_86 = arith.constant 0 : index
    %115 = vector.load %arg5[%c28_85, %c0_86] : memref<128x32xf32, #tpu.memory_space<vmem>>, vector<1x32xf32>
    tpu.vector_store %arg5[%c28_85, %c0_86], %114 {strides = array<i32>} : memref<128x32xf32, #tpu.memory_space<vmem>>, vector<1x32xf32>,
    %c29 = arith.constant 29 : index
    %116 = memref.load %arg0[%c29] : memref<128xi32, #tpu.memory_space<smem>>
    %117 = arith.index_cast %116 : i32 to index
    %c0_87 = arith.constant 0 : index
    %118 = vector.load %arg1[%117, %c0_87] : memref<32x32xf32, #tpu.memory_space<vmem>>, vector<1x32xf32>
    %c29_88 = arith.constant 29 : index
    %c0_89 = arith.constant 0 : index
    %119 = vector.load %arg5[%c29_88, %c0_89] : memref<128x32xf32, #tpu.memory_space<vmem>>, vector<1x32xf32>
    tpu.vector_store %arg5[%c29_88, %c0_89], %118 {strides = array<i32>} : memref<128x32xf32, #tpu.memory_space<vmem>>, vector<1x32xf32>,
    %c30 = arith.constant 30 : index
    %120 = memref.load %arg0[%c30] : memref<128xi32, #tpu.memory_space<smem>>
    %121 = arith.index_cast %120 : i32 to index
    %c0_90 = arith.constant 0 : index
    %122 = vector.load %arg1[%121, %c0_90] : memref<32x32xf32, #tpu.memory_space<vmem>>, vector<1x32xf32>
    %c30_91 = arith.constant 30 : index
    %c0_92 = arith.constant 0 : index
    %123 = vector.load %arg5[%c30_91, %c0_92] : memref<128x32xf32, #tpu.memory_space<vmem>>, vector<1x32xf32>
    tpu.vector_store %arg5[%c30_91, %c0_92], %122 {strides = array<i32>} : memref<128x32xf32, #tpu.memory_space<vmem>>, vector<1x32xf32>,
    %c31 = arith.constant 31 : index
    %124 = memref.load %arg0[%c31] : memref<128xi32, #tpu.memory_space<smem>>
    %125 = arith.index_cast %124 : i32 to index
    %c0_93 = arith.constant 0 : index
    %126 = vector.load %arg1[%125, %c0_93] : memref<32x32xf32, #tpu.memory_space<vmem>>, vector<1x32xf32>
    %c31_94 = arith.constant 31 : index
    %c0_95 = arith.constant 0 : index
    %127 = vector.load %arg5[%c31_94, %c0_95] : memref<128x32xf32, #tpu.memory_space<vmem>>, vector<1x32xf32>
    tpu.vector_store %arg5[%c31_94, %c0_95], %126 {strides = array<i32>} : memref<128x32xf32, #tpu.memory_space<vmem>>, vector<1x32xf32>,
    %c32 = arith.constant 32 : index
    %128 = memref.load %arg0[%c32] : memref<128xi32, #tpu.memory_space<smem>>
    %129 = arith.index_cast %128 : i32 to index
    %c0_96 = arith.constant 0 : index
    %130 = vector.load %arg1[%129, %c0_96] : memref<32x32xf32, #tpu.memory_space<vmem>>, vector<1x32xf32>
    %c32_97 = arith.constant 32 : index
    %c0_98 = arith.constant 0 : index
    %131 = vector.load %arg5[%c32_97, %c0_98] : memref<128x32xf32, #tpu.memory_space<vmem>>, vector<1x32xf32>
    tpu.vector_store %arg5[%c32_97, %c0_98], %130 {strides = array<i32>} : memref<128x32xf32, #tpu.memory_space<vmem>>, vector<1x32xf32>,
    %c33 = arith.constant 33 : index
    %132 = memref.load %arg0[%c33] : memref<128xi32, #tpu.memory_space<smem>>
    %133 = arith.index_cast %132 : i32 to index
    %c0_99 = arith.constant 0 : index
    %134 = vector.load %arg1[%133, %c0_99] : memref<32x32xf32, #tpu.memory_space<vmem>>, vector<1x32xf32>
    %c33_100 = arith.constant 33 : index
    %c0_101 = arith.constant 0 : index
    %135 = vector.load %arg5[%c33_100, %c0_101] : memref<128x32xf32, #tpu.memory_space<vmem>>, vector<1x32xf32>
    tpu.vector_store %arg5[%c33_100, %c0_101], %134 {strides = array<i32>} : memref<128x32xf32, #tpu.memory_space<vmem>>, vector<1x32xf32>,
    %c34 = arith.constant 34 : index
    %136 = memref.load %arg0[%c34] : memref<128xi32, #tpu.memory_space<smem>>
    %137 = arith.index_cast %136 : i32 to index
    %c0_102 = arith.constant 0 : index
    %138 = vector.load %arg1[%137, %c0_102] : memref<32x32xf32, #tpu.memory_space<vmem>>, vector<1x32xf32>
    %c34_103 = arith.constant 34 : index
    %c0_104 = arith.constant 0 : index
    %139 = vector.load %arg5[%c34_103, %c0_104] : memref<128x32xf32, #tpu.memory_space<vmem>>, vector<1x32xf32>
    tpu.vector_store %arg5[%c34_103, %c0_104], %138 {strides = array<i32>} : memref<128x32xf32, #tpu.memory_space<vmem>>, vector<1x32xf32>,
    %c35 = arith.constant 35 : index
    %140 = memref.load %arg0[%c35] : memref<128xi32, #tpu.memory_space<smem>>
    %141 = arith.index_cast %140 : i32 to index
    %c0_105 = arith.constant 0 : index
    %142 = vector.load %arg1[%141, %c0_105] : memref<32x32xf32, #tpu.memory_space<vmem>>, vector<1x32xf32>
    %c35_106 = arith.constant 35 : index
    %c0_107 = arith.constant 0 : index
    %143 = vector.load %arg5[%c35_106, %c0_107] : memref<128x32xf32, #tpu.memory_space<vmem>>, vector<1x32xf32>
    tpu.vector_store %arg5[%c35_106, %c0_107], %142 {strides = array<i32>} : memref<128x32xf32, #tpu.memory_space<vmem>>, vector<1x32xf32>,
    %c36 = arith.constant 36 : index
    %144 = memref.load %arg0[%c36] : memref<128xi32, #tpu.memory_space<smem>>
    %145 = arith.index_cast %144 : i32 to index
    %c0_108 = arith.constant 0 : index
    %146 = vector.load %arg1[%145, %c0_108] : memref<32x32xf32, #tpu.memory_space<vmem>>, vector<1x32xf32>
    %c36_109 = arith.constant 36 : index
    %c0_110 = arith.constant 0 : index
    %147 = vector.load %arg5[%c36_109, %c0_110] : memref<128x32xf32, #tpu.memory_space<vmem>>, vector<1x32xf32>
    tpu.vector_store %arg5[%c36_109, %c0_110], %146 {strides = array<i32>} : memref<128x32xf32, #tpu.memory_space<vmem>>, vector<1x32xf32>,
    %c37 = arith.constant 37 : index
    %148 = memref.load %arg0[%c37] : memref<128xi32, #tpu.memory_space<smem>>
    %149 = arith.index_cast %148 : i32 to index
    %c0_111 = arith.constant 0 : index
    %150 = vector.load %arg1[%149, %c0_111] : memref<32x32xf32, #tpu.memory_space<vmem>>, vector<1x32xf32>
    %c37_112 = arith.constant 37 : index
    %c0_113 = arith.constant 0 : index
    %151 = vector.load %arg5[%c37_112, %c0_113] : memref<128x32xf32, #tpu.memory_space<vmem>>, vector<1x32xf32>
    tpu.vector_store %arg5[%c37_112, %c0_113], %150 {strides = array<i32>} : memref<128x32xf32, #tpu.memory_space<vmem>>, vector<1x32xf32>,
    %c38 = arith.constant 38 : index
    %152 = memref.load %arg0[%c38] : memref<128xi32, #tpu.memory_space<smem>>
    %153 = arith.index_cast %152 : i32 to index
    %c0_114 = arith.constant 0 : index
    %154 = vector.load %arg1[%153, %c0_114] : memref<32x32xf32, #tpu.memory_space<vmem>>, vector<1x32xf32>
    %c38_115 = arith.constant 38 : index
    %c0_116 = arith.constant 0 : index
    %155 = vector.load %arg5[%c38_115, %c0_116] : memref<128x32xf32, #tpu.memory_space<vmem>>, vector<1x32xf32>
    tpu.vector_store %arg5[%c38_115, %c0_116], %154 {strides = array<i32>} : memref<128x32xf32, #tpu.memory_space<vmem>>, vector<1x32xf32>,
    %c39 = arith.constant 39 : index
    %156 = memref.load %arg0[%c39] : memref<128xi32, #tpu.memory_space<smem>>
    %157 = arith.index_cast %156 : i32 to index
    %c0_117 = arith.constant 0 : index
    %158 = vector.load %arg1[%157, %c0_117] : memref<32x32xf32, #tpu.memory_space<vmem>>, vector<1x32xf32>
    %c39_118 = arith.constant 39 : index
    %c0_119 = arith.constant 0 : index
    %159 = vector.load %arg5[%c39_118, %c0_119] : memref<128x32xf32, #tpu.memory_space<vmem>>, vector<1x32xf32>
    tpu.vector_store %arg5[%c39_118, %c0_119], %158 {strides = array<i32>} : memref<128x32xf32, #tpu.memory_space<vmem>>, vector<1x32xf32>,
    %c40 = arith.constant 40 : index
    %160 = memref.load %arg0[%c40] : memref<128xi32, #tpu.memory_space<smem>>
    %161 = arith.index_cast %160 : i32 to index
    %c0_120 = arith.constant 0 : index
    %162 = vector.load %arg1[%161, %c0_120] : memref<32x32xf32, #tpu.memory_space<vmem>>, vector<1x32xf32>
    %c40_121 = arith.constant 40 : index
    %c0_122 = arith.constant 0 : index
    %163 = vector.load %arg5[%c40_121, %c0_122] : memref<128x32xf32, #tpu.memory_space<vmem>>, vector<1x32xf32>
    tpu.vector_store %arg5[%c40_121, %c0_122], %162 {strides = array<i32>} : memref<128x32xf32, #tpu.memory_space<vmem>>, vector<1x32xf32>,
    %c41 = arith.constant 41 : index
    %164 = memref.load %arg0[%c41] : memref<128xi32, #tpu.memory_space<smem>>
    %165 = arith.index_cast %164 : i32 to index
    %c0_123 = arith.constant 0 : index
    %166 = vector.load %arg1[%165, %c0_123] : memref<32x32xf32, #tpu.memory_space<vmem>>, vector<1x32xf32>
    %c41_124 = arith.constant 41 : index
    %c0_125 = arith.constant 0 : index
    %167 = vector.load %arg5[%c41_124, %c0_125] : memref<128x32xf32, #tpu.memory_space<vmem>>, vector<1x32xf32>
    tpu.vector_store %arg5[%c41_124, %c0_125], %166 {strides = array<i32>} : memref<128x32xf32, #tpu.memory_space<vmem>>, vector<1x32xf32>,
    %c42 = arith.constant 42 : index
    %168 = memref.load %arg0[%c42] : memref<128xi32, #tpu.memory_space<smem>>
    %169 = arith.index_cast %168 : i32 to index
    %c0_126 = arith.constant 0 : index
    %170 = vector.load %arg1[%169, %c0_126] : memref<32x32xf32, #tpu.memory_space<vmem>>, vector<1x32xf32>
    %c42_127 = arith.constant 42 : index
    %c0_128 = arith.constant 0 : index
    %171 = vector.load %arg5[%c42_127, %c0_128] : memref<128x32xf32, #tpu.memory_space<vmem>>, vector<1x32xf32>
    tpu.vector_store %arg5[%c42_127, %c0_128], %170 {strides = array<i32>} : memref<128x32xf32, #tpu.memory_space<vmem>>, vector<1x32xf32>,
    %c43 = arith.constant 43 : index
    %172 = memref.load %arg0[%c43] : memref<128xi32, #tpu.memory_space<smem>>
    %173 = arith.index_cast %172 : i32 to index
    %c0_129 = arith.constant 0 : index
    %174 = vector.load %arg1[%173, %c0_129] : memref<32x32xf32, #tpu.memory_space<vmem>>, vector<1x32xf32>
    %c43_130 = arith.constant 43 : index
    %c0_131 = arith.constant 0 : index
    %175 = vector.load %arg5[%c43_130, %c0_131] : memref<128x32xf32, #tpu.memory_space<vmem>>, vector<1x32xf32>
    tpu.vector_store %arg5[%c43_130, %c0_131], %174 {strides = array<i32>} : memref<128x32xf32, #tpu.memory_space<vmem>>, vector<1x32xf32>,
    %c44 = arith.constant 44 : index
    %176 = memref.load %arg0[%c44] : memref<128xi32, #tpu.memory_space<smem>>
    %177 = arith.index_cast %176 : i32 to index
    %c0_132 = arith.constant 0 : index
    %178 = vector.load %arg1[%177, %c0_132] : memref<32x32xf32, #tpu.memory_space<vmem>>, vector<1x32xf32>
    %c44_133 = arith.constant 44 : index
    %c0_134 = arith.constant 0 : index
    %179 = vector.load %arg5[%c44_133, %c0_134] : memref<128x32xf32, #tpu.memory_space<vmem>>, vector<1x32xf32>
    tpu.vector_store %arg5[%c44_133, %c0_134], %178 {strides = array<i32>} : memref<128x32xf32, #tpu.memory_space<vmem>>, vector<1x32xf32>,
    %c45 = arith.constant 45 : index
    %180 = memref.load %arg0[%c45] : memref<128xi32, #tpu.memory_space<smem>>
    %181 = arith.index_cast %180 : i32 to index
    %c0_135 = arith.constant 0 : index
    %182 = vector.load %arg1[%181, %c0_135] : memref<32x32xf32, #tpu.memory_space<vmem>>, vector<1x32xf32>
    %c45_136 = arith.constant 45 : index
    %c0_137 = arith.constant 0 : index
    %183 = vector.load %arg5[%c45_136, %c0_137] : memref<128x32xf32, #tpu.memory_space<vmem>>, vector<1x32xf32>
    tpu.vector_store %arg5[%c45_136, %c0_137], %182 {strides = array<i32>} : memref<128x32xf32, #tpu.memory_space<vmem>>, vector<1x32xf32>,
    %c46 = arith.constant 46 : index
    %184 = memref.load %arg0[%c46] : memref<128xi32, #tpu.memory_space<smem>>
    %185 = arith.index_cast %184 : i32 to index
    %c0_138 = arith.constant 0 : index
    %186 = vector.load %arg1[%185, %c0_138] : memref<32x32xf32, #tpu.memory_space<vmem>>, vector<1x32xf32>
    %c46_139 = arith.constant 46 : index
    %c0_140 = arith.constant 0 : index
    %187 = vector.load %arg5[%c46_139, %c0_140] : memref<128x32xf32, #tpu.memory_space<vmem>>, vector<1x32xf32>
    tpu.vector_store %arg5[%c46_139, %c0_140], %186 {strides = array<i32>} : memref<128x32xf32, #tpu.memory_space<vmem>>, vector<1x32xf32>,
    %c47 = arith.constant 47 : index
    %188 = memref.load %arg0[%c47] : memref<128xi32, #tpu.memory_space<smem>>
    %189 = arith.index_cast %188 : i32 to index
    %c0_141 = arith.constant 0 : index
    %190 = vector.load %arg1[%189, %c0_141] : memref<32x32xf32, #tpu.memory_space<vmem>>, vector<1x32xf32>
    %c47_142 = arith.constant 47 : index
    %c0_143 = arith.constant 0 : index
    %191 = vector.load %arg5[%c47_142, %c0_143] : memref<128x32xf32, #tpu.memory_space<vmem>>, vector<1x32xf32>
    tpu.vector_store %arg5[%c47_142, %c0_143], %190 {strides = array<i32>} : memref<128x32xf32, #tpu.memory_space<vmem>>, vector<1x32xf32>,
    %c48 = arith.constant 48 : index
    %192 = memref.load %arg0[%c48] : memref<128xi32, #tpu.memory_space<smem>>
    %193 = arith.index_cast %192 : i32 to index
    %c0_144 = arith.constant 0 : index
    %194 = vector.load %arg1[%193, %c0_144] : memref<32x32xf32, #tpu.memory_space<vmem>>, vector<1x32xf32>
    %c48_145 = arith.constant 48 : index
    %c0_146 = arith.constant 0 : index
    %195 = vector.load %arg5[%c48_145, %c0_146] : memref<128x32xf32, #tpu.memory_space<vmem>>, vector<1x32xf32>
    tpu.vector_store %arg5[%c48_145, %c0_146], %194 {strides = array<i32>} : memref<128x32xf32, #tpu.memory_space<vmem>>, vector<1x32xf32>,
    %c49 = arith.constant 49 : index
    %196 = memref.load %arg0[%c49] : memref<128xi32, #tpu.memory_space<smem>>
    %197 = arith.index_cast %196 : i32 to index
    %c0_147 = arith.constant 0 : index
    %198 = vector.load %arg1[%197, %c0_147] : memref<32x32xf32, #tpu.memory_space<vmem>>, vector<1x32xf32>
    %c49_148 = arith.constant 49 : index
    %c0_149 = arith.constant 0 : index
    %199 = vector.load %arg5[%c49_148, %c0_149] : memref<128x32xf32, #tpu.memory_space<vmem>>, vector<1x32xf32>
    tpu.vector_store %arg5[%c49_148, %c0_149], %198 {strides = array<i32>} : memref<128x32xf32, #tpu.memory_space<vmem>>, vector<1x32xf32>,
    %c50 = arith.constant 50 : index
    %200 = memref.load %arg0[%c50] : memref<128xi32, #tpu.memory_space<smem>>
    %201 = arith.index_cast %200 : i32 to index
    %c0_150 = arith.constant 0 : index
    %202 = vector.load %arg1[%201, %c0_150] : memref<32x32xf32, #tpu.memory_space<vmem>>, vector<1x32xf32>
    %c50_151 = arith.constant 50 : index
    %c0_152 = arith.constant 0 : index
    %203 = vector.load %arg5[%c50_151, %c0_152] : memref<128x32xf32, #tpu.memory_space<vmem>>, vector<1x32xf32>
    tpu.vector_store %arg5[%c50_151, %c0_152], %202 {strides = array<i32>} : memref<128x32xf32, #tpu.memory_space<vmem>>, vector<1x32xf32>,
    %c51 = arith.constant 51 : index
    %204 = memref.load %arg0[%c51] : memref<128xi32, #tpu.memory_space<smem>>
    %205 = arith.index_cast %204 : i32 to index
    %c0_153 = arith.constant 0 : index
    %206 = vector.load %arg1[%205, %c0_153] : memref<32x32xf32, #tpu.memory_space<vmem>>, vector<1x32xf32>
    %c51_154 = arith.constant 51 : index
    %c0_155 = arith.constant 0 : index
    %207 = vector.load %arg5[%c51_154, %c0_155] : memref<128x32xf32, #tpu.memory_space<vmem>>, vector<1x32xf32>
    tpu.vector_store %arg5[%c51_154, %c0_155], %206 {strides = array<i32>} : memref<128x32xf32, #tpu.memory_space<vmem>>, vector<1x32xf32>,
    %c52 = arith.constant 52 : index
    %208 = memref.load %arg0[%c52] : memref<128xi32, #tpu.memory_space<smem>>
    %209 = arith.index_cast %208 : i32 to index
    %c0_156 = arith.constant 0 : index
    %210 = vector.load %arg1[%209, %c0_156] : memref<32x32xf32, #tpu.memory_space<vmem>>, vector<1x32xf32>
    %c52_157 = arith.constant 52 : index
    %c0_158 = arith.constant 0 : index
    %211 = vector.load %arg5[%c52_157, %c0_158] : memref<128x32xf32, #tpu.memory_space<vmem>>, vector<1x32xf32>
    tpu.vector_store %arg5[%c52_157, %c0_158], %210 {strides = array<i32>} : memref<128x32xf32, #tpu.memory_space<vmem>>, vector<1x32xf32>,
    %c53 = arith.constant 53 : index
    %212 = memref.load %arg0[%c53] : memref<128xi32, #tpu.memory_space<smem>>
    %213 = arith.index_cast %212 : i32 to index
    %c0_159 = arith.constant 0 : index
    %214 = vector.load %arg1[%213, %c0_159] : memref<32x32xf32, #tpu.memory_space<vmem>>, vector<1x32xf32>
    %c53_160 = arith.constant 53 : index
    %c0_161 = arith.constant 0 : index
    %215 = vector.load %arg5[%c53_160, %c0_161] : memref<128x32xf32, #tpu.memory_space<vmem>>, vector<1x32xf32>
    tpu.vector_store %arg5[%c53_160, %c0_161], %214 {strides = array<i32>} : memref<128x32xf32, #tpu.memory_space<vmem>>, vector<1x32xf32>,
    %c54 = arith.constant 54 : index
    %216 = memref.load %arg0[%c54] : memref<128xi32, #tpu.memory_space<smem>>
    %217 = arith.index_cast %216 : i32 to index
    %c0_162 = arith.constant 0 : index
    %218 = vector.load %arg1[%217, %c0_162] : memref<32x32xf32, #tpu.memory_space<vmem>>, vector<1x32xf32>
    %c54_163 = arith.constant 54 : index
    %c0_164 = arith.constant 0 : index
    %219 = vector.load %arg5[%c54_163, %c0_164] : memref<128x32xf32, #tpu.memory_space<vmem>>, vector<1x32xf32>
    tpu.vector_store %arg5[%c54_163, %c0_164], %218 {strides = array<i32>} : memref<128x32xf32, #tpu.memory_space<vmem>>, vector<1x32xf32>,
    %c55 = arith.constant 55 : index
    %220 = memref.load %arg0[%c55] : memref<128xi32, #tpu.memory_space<smem>>
    %221 = arith.index_cast %220 : i32 to index
    %c0_165 = arith.constant 0 : index
    %222 = vector.load %arg1[%221, %c0_165] : memref<32x32xf32, #tpu.memory_space<vmem>>, vector<1x32xf32>
    %c55_166 = arith.constant 55 : index
    %c0_167 = arith.constant 0 : index
    %223 = vector.load %arg5[%c55_166, %c0_167] : memref<128x32xf32, #tpu.memory_space<vmem>>, vector<1x32xf32>
    tpu.vector_store %arg5[%c55_166, %c0_167], %222 {strides = array<i32>} : memref<128x32xf32, #tpu.memory_space<vmem>>, vector<1x32xf32>,
    %c56 = arith.constant 56 : index
    %224 = memref.load %arg0[%c56] : memref<128xi32, #tpu.memory_space<smem>>
    %225 = arith.index_cast %224 : i32 to index
    %c0_168 = arith.constant 0 : index
    %226 = vector.load %arg1[%225, %c0_168] : memref<32x32xf32, #tpu.memory_space<vmem>>, vector<1x32xf32>
    %c56_169 = arith.constant 56 : index
    %c0_170 = arith.constant 0 : index
    %227 = vector.load %arg5[%c56_169, %c0_170] : memref<128x32xf32, #tpu.memory_space<vmem>>, vector<1x32xf32>
    tpu.vector_store %arg5[%c56_169, %c0_170], %226 {strides = array<i32>} : memref<128x32xf32, #tpu.memory_space<vmem>>, vector<1x32xf32>,
    %c57 = arith.constant 57 : index
    %228 = memref.load %arg0[%c57] : memref<128xi32, #tpu.memory_space<smem>>
    %229 = arith.index_cast %228 : i32 to index
    %c0_171 = arith.constant 0 : index
    %230 = vector.load %arg1[%229, %c0_171] : memref<32x32xf32, #tpu.memory_space<vmem>>, vector<1x32xf32>
    %c57_172 = arith.constant 57 : index
    %c0_173 = arith.constant 0 : index
    %231 = vector.load %arg5[%c57_172, %c0_173] : memref<128x32xf32, #tpu.memory_space<vmem>>, vector<1x32xf32>
    tpu.vector_store %arg5[%c57_172, %c0_173], %230 {strides = array<i32>} : memref<128x32xf32, #tpu.memory_space<vmem>>, vector<1x32xf32>,
    %c58 = arith.constant 58 : index
    %232 = memref.load %arg0[%c58] : memref<128xi32, #tpu.memory_space<smem>>
    %233 = arith.index_cast %232 : i32 to index
    %c0_174 = arith.constant 0 : index
    %234 = vector.load %arg1[%233, %c0_174] : memref<32x32xf32, #tpu.memory_space<vmem>>, vector<1x32xf32>
    %c58_175 = arith.constant 58 : index
    %c0_176 = arith.constant 0 : index
    %235 = vector.load %arg5[%c58_175, %c0_176] : memref<128x32xf32, #tpu.memory_space<vmem>>, vector<1x32xf32>
    tpu.vector_store %arg5[%c58_175, %c0_176], %234 {strides = array<i32>} : memref<128x32xf32, #tpu.memory_space<vmem>>, vector<1x32xf32>,
    %c59 = arith.constant 59 : index
    %236 = memref.load %arg0[%c59] : memref<128xi32, #tpu.memory_space<smem>>
    %237 = arith.index_cast %236 : i32 to index
    %c0_177 = arith.constant 0 : index
    %238 = vector.load %arg1[%237, %c0_177] : memref<32x32xf32, #tpu.memory_space<vmem>>, vector<1x32xf32>
    %c59_178 = arith.constant 59 : index
    %c0_179 = arith.constant 0 : index
    %239 = vector.load %arg5[%c59_178, %c0_179] : memref<128x32xf32, #tpu.memory_space<vmem>>, vector<1x32xf32>
    tpu.vector_store %arg5[%c59_178, %c0_179], %238 {strides = array<i32>} : memref<128x32xf32, #tpu.memory_space<vmem>>, vector<1x32xf32>,
    %c60 = arith.constant 60 : index
    %240 = memref.load %arg0[%c60] : memref<128xi32, #tpu.memory_space<smem>>
    %241 = arith.index_cast %240 : i32 to index
    %c0_180 = arith.constant 0 : index
    %242 = vector.load %arg1[%241, %c0_180] : memref<32x32xf32, #tpu.memory_space<vmem>>, vector<1x32xf32>
    %c60_181 = arith.constant 60 : index
    %c0_182 = arith.constant 0 : index
    %243 = vector.load %arg5[%c60_181, %c0_182] : memref<128x32xf32, #tpu.memory_space<vmem>>, vector<1x32xf32>
    tpu.vector_store %arg5[%c60_181, %c0_182], %242 {strides = array<i32>} : memref<128x32xf32, #tpu.memory_space<vmem>>, vector<1x32xf32>,
    %c61 = arith.constant 61 : index
    %244 = memref.load %arg0[%c61] : memref<128xi32, #tpu.memory_space<smem>>
    %245 = arith.index_cast %244 : i32 to index
    %c0_183 = arith.constant 0 : index
    %246 = vector.load %arg1[%245, %c0_183] : memref<32x32xf32, #tpu.memory_space<vmem>>, vector<1x32xf32>
    %c61_184 = arith.constant 61 : index
    %c0_185 = arith.constant 0 : index
    %247 = vector.load %arg5[%c61_184, %c0_185] : memref<128x32xf32, #tpu.memory_space<vmem>>, vector<1x32xf32>
    tpu.vector_store %arg5[%c61_184, %c0_185], %246 {strides = array<i32>} : memref<128x32xf32, #tpu.memory_space<vmem>>, vector<1x32xf32>,
    %c62 = arith.constant 62 : index
    %248 = memref.load %arg0[%c62] : memref<128xi32, #tpu.memory_space<smem>>
    %249 = arith.index_cast %248 : i32 to index
    %c0_186 = arith.constant 0 : index
    %250 = vector.load %arg1[%249, %c0_186] : memref<32x32xf32, #tpu.memory_space<vmem>>, vector<1x32xf32>
    %c62_187 = arith.constant 62 : index
    %c0_188 = arith.constant 0 : index
    %251 = vector.load %arg5[%c62_187, %c0_188] : memref<128x32xf32, #tpu.memory_space<vmem>>, vector<1x32xf32>
    tpu.vector_store %arg5[%c62_187, %c0_188], %250 {strides = array<i32>} : memref<128x32xf32, #tpu.memory_space<vmem>>, vector<1x32xf32>,
    %c63 = arith.constant 63 : index
    %252 = memref.load %arg0[%c63] : memref<128xi32, #tpu.memory_space<smem>>
    %253 = arith.index_cast %252 : i32 to index
    %c0_189 = arith.constant 0 : index
    %254 = vector.load %arg1[%253, %c0_189] : memref<32x32xf32, #tpu.memory_space<vmem>>, vector<1x32xf32>
    %c63_190 = arith.constant 63 : index
    %c0_191 = arith.constant 0 : index
    %255 = vector.load %arg5[%c63_190, %c0_191] : memref<128x32xf32, #tpu.memory_space<vmem>>, vector<1x32xf32>
    tpu.vector_store %arg5[%c63_190, %c0_191], %254 {strides = array<i32>} : memref<128x32xf32, #tpu.memory_space<vmem>>, vector<1x32xf32>,
    %c64 = arith.constant 64 : index
    %256 = memref.load %arg0[%c64] : memref<128xi32, #tpu.memory_space<smem>>
    %257 = arith.index_cast %256 : i32 to index
    %c0_192 = arith.constant 0 : index
    %258 = vector.load %arg1[%257, %c0_192] : memref<32x32xf32, #tpu.memory_space<vmem>>, vector<1x32xf32>
    %c64_193 = arith.constant 64 : index
    %c0_194 = arith.constant 0 : index
    %259 = vector.load %arg5[%c64_193, %c0_194] : memref<128x32xf32, #tpu.memory_space<vmem>>, vector<1x32xf32>
    tpu.vector_store %arg5[%c64_193, %c0_194], %258 {strides = array<i32>} : memref<128x32xf32, #tpu.memory_space<vmem>>, vector<1x32xf32>,
    %c65 = arith.constant 65 : index
    %260 = memref.load %arg0[%c65] : memref<128xi32, #tpu.memory_space<smem>>
    %261 = arith.index_cast %260 : i32 to index
    %c0_195 = arith.constant 0 : index
    %262 = vector.load %arg1[%261, %c0_195] : memref<32x32xf32, #tpu.memory_space<vmem>>, vector<1x32xf32>
    %c65_196 = arith.constant 65 : index
    %c0_197 = arith.constant 0 : index
    %263 = vector.load %arg5[%c65_196, %c0_197] : memref<128x32xf32, #tpu.memory_space<vmem>>, vector<1x32xf32>
    tpu.vector_store %arg5[%c65_196, %c0_197], %262 {strides = array<i32>} : memref<128x32xf32, #tpu.memory_space<vmem>>, vector<1x32xf32>,
    %c66 = arith.constant 66 : index
    %264 = memref.load %arg0[%c66] : memref<128xi32, #tpu.memory_space<smem>>
    %265 = arith.index_cast %264 : i32 to index
    %c0_198 = arith.constant 0 : index
    %266 = vector.load %arg1[%265, %c0_198] : memref<32x32xf32, #tpu.memory_space<vmem>>, vector<1x32xf32>
    %c66_199 = arith.constant 66 : index
    %c0_200 = arith.constant 0 : index
    %267 = vector.load %arg5[%c66_199, %c0_200] : memref<128x32xf32, #tpu.memory_space<vmem>>, vector<1x32xf32>
    tpu.vector_store %arg5[%c66_199, %c0_200], %266 {strides = array<i32>} : memref<128x32xf32, #tpu.memory_space<vmem>>, vector<1x32xf32>,
    %c67 = arith.constant 67 : index
    %268 = memref.load %arg0[%c67] : memref<128xi32, #tpu.memory_space<smem>>
    %269 = arith.index_cast %268 : i32 to index
    %c0_201 = arith.constant 0 : index
    %270 = vector.load %arg1[%269, %c0_201] : memref<32x32xf32, #tpu.memory_space<vmem>>, vector<1x32xf32>
    %c67_202 = arith.constant 67 : index
    %c0_203 = arith.constant 0 : index
    %271 = vector.load %arg5[%c67_202, %c0_203] : memref<128x32xf32, #tpu.memory_space<vmem>>, vector<1x32xf32>
    tpu.vector_store %arg5[%c67_202, %c0_203], %270 {strides = array<i32>} : memref<128x32xf32, #tpu.memory_space<vmem>>, vector<1x32xf32>,
    %c68 = arith.constant 68 : index
    %272 = memref.load %arg0[%c68] : memref<128xi32, #tpu.memory_space<smem>>
    %273 = arith.index_cast %272 : i32 to index
    %c0_204 = arith.constant 0 : index
    %274 = vector.load %arg1[%273, %c0_204] : memref<32x32xf32, #tpu.memory_space<vmem>>, vector<1x32xf32>
    %c68_205 = arith.constant 68 : index
    %c0_206 = arith.constant 0 : index
    %275 = vector.load %arg5[%c68_205, %c0_206] : memref<128x32xf32, #tpu.memory_space<vmem>>, vector<1x32xf32>
    tpu.vector_store %arg5[%c68_205, %c0_206], %274 {strides = array<i32>} : memref<128x32xf32, #tpu.memory_space<vmem>>, vector<1x32xf32>,
    %c69 = arith.constant 69 : index
    %276 = memref.load %arg0[%c69] : memref<128xi32, #tpu.memory_space<smem>>
    %277 = arith.index_cast %276 : i32 to index
    %c0_207 = arith.constant 0 : index
    %278 = vector.load %arg1[%277, %c0_207] : memref<32x32xf32, #tpu.memory_space<vmem>>, vector<1x32xf32>
    %c69_208 = arith.constant 69 : index
    %c0_209 = arith.constant 0 : index
    %279 = vector.load %arg5[%c69_208, %c0_209] : memref<128x32xf32, #tpu.memory_space<vmem>>, vector<1x32xf32>
    tpu.vector_store %arg5[%c69_208, %c0_209], %278 {strides = array<i32>} : memref<128x32xf32, #tpu.memory_space<vmem>>, vector<1x32xf32>,
    %c70 = arith.constant 70 : index
    %280 = memref.load %arg0[%c70] : memref<128xi32, #tpu.memory_space<smem>>
    %281 = arith.index_cast %280 : i32 to index
    %c0_210 = arith.constant 0 : index
    %282 = vector.load %arg1[%281, %c0_210] : memref<32x32xf32, #tpu.memory_space<vmem>>, vector<1x32xf32>
    %c70_211 = arith.constant 70 : index
    %c0_212 = arith.constant 0 : index
    %283 = vector.load %arg5[%c70_211, %c0_212] : memref<128x32xf32, #tpu.memory_space<vmem>>, vector<1x32xf32>
    tpu.vector_store %arg5[%c70_211, %c0_212], %282 {strides = array<i32>} : memref<128x32xf32, #tpu.memory_space<vmem>>, vector<1x32xf32>,
    %c71 = arith.constant 71 : index
    %284 = memref.load %arg0[%c71] : memref<128xi32, #tpu.memory_space<smem>>
    %285 = arith.index_cast %284 : i32 to index
    %c0_213 = arith.constant 0 : index
    %286 = vector.load %arg1[%285, %c0_213] : memref<32x32xf32, #tpu.memory_space<vmem>>, vector<1x32xf32>
    %c71_214 = arith.constant 71 : index
    %c0_215 = arith.constant 0 : index
    %287 = vector.load %arg5[%c71_214, %c0_215] : memref<128x32xf32, #tpu.memory_space<vmem>>, vector<1x32xf32>
    tpu.vector_store %arg5[%c71_214, %c0_215], %286 {strides = array<i32>} : memref<128x32xf32, #tpu.memory_space<vmem>>, vector<1x32xf32>,
    %c72 = arith.constant 72 : index
    %288 = memref.load %arg0[%c72] : memref<128xi32, #tpu.memory_space<smem>>
    %289 = arith.index_cast %288 : i32 to index
    %c0_216 = arith.constant 0 : index
    %290 = vector.load %arg1[%289, %c0_216] : memref<32x32xf32, #tpu.memory_space<vmem>>, vector<1x32xf32>
    %c72_217 = arith.constant 72 : index
    %c0_218 = arith.constant 0 : index
    %291 = vector.load %arg5[%c72_217, %c0_218] : memref<128x32xf32, #tpu.memory_space<vmem>>, vector<1x32xf32>
    tpu.vector_store %arg5[%c72_217, %c0_218], %290 {strides = array<i32>} : memref<128x32xf32, #tpu.memory_space<vmem>>, vector<1x32xf32>,
    %c73 = arith.constant 73 : index
    %292 = memref.load %arg0[%c73] : memref<128xi32, #tpu.memory_space<smem>>
    %293 = arith.index_cast %292 : i32 to index
    %c0_219 = arith.constant 0 : index
    %294 = vector.load %arg1[%293, %c0_219] : memref<32x32xf32, #tpu.memory_space<vmem>>, vector<1x32xf32>
    %c73_220 = arith.constant 73 : index
    %c0_221 = arith.constant 0 : index
    %295 = vector.load %arg5[%c73_220, %c0_221] : memref<128x32xf32, #tpu.memory_space<vmem>>, vector<1x32xf32>
    tpu.vector_store %arg5[%c73_220, %c0_221], %294 {strides = array<i32>} : memref<128x32xf32, #tpu.memory_space<vmem>>, vector<1x32xf32>,
    %c74 = arith.constant 74 : index
    %296 = memref.load %arg0[%c74] : memref<128xi32, #tpu.memory_space<smem>>
    %297 = arith.index_cast %296 : i32 to index
    %c0_222 = arith.constant 0 : index
    %298 = vector.load %arg1[%297, %c0_222] : memref<32x32xf32, #tpu.memory_space<vmem>>, vector<1x32xf32>
    %c74_223 = arith.constant 74 : index
    %c0_224 = arith.constant 0 : index
    %299 = vector.load %arg5[%c74_223, %c0_224] : memref<128x32xf32, #tpu.memory_space<vmem>>, vector<1x32xf32>
    tpu.vector_store %arg5[%c74_223, %c0_224], %298 {strides = array<i32>} : memref<128x32xf32, #tpu.memory_space<vmem>>, vector<1x32xf32>,
    %c75 = arith.constant 75 : index
    %300 = memref.load %arg0[%c75] : memref<128xi32, #tpu.memory_space<smem>>
    %301 = arith.index_cast %300 : i32 to index
    %c0_225 = arith.constant 0 : index
    %302 = vector.load %arg1[%301, %c0_225] : memref<32x32xf32, #tpu.memory_space<vmem>>, vector<1x32xf32>
    %c75_226 = arith.constant 75 : index
    %c0_227 = arith.constant 0 : index
    %303 = vector.load %arg5[%c75_226, %c0_227] : memref<128x32xf32, #tpu.memory_space<vmem>>, vector<1x32xf32>
    tpu.vector_store %arg5[%c75_226, %c0_227], %302 {strides = array<i32>} : memref<128x32xf32, #tpu.memory_space<vmem>>, vector<1x32xf32>,
    %c76 = arith.constant 76 : index
    %304 = memref.load %arg0[%c76] : memref<128xi32, #tpu.memory_space<smem>>
    %305 = arith.index_cast %304 : i32 to index
    %c0_228 = arith.constant 0 : index
    %306 = vector.load %arg1[%305, %c0_228] : memref<32x32xf32, #tpu.memory_space<vmem>>, vector<1x32xf32>
    %c76_229 = arith.constant 76 : index
    %c0_230 = arith.constant 0 : index
    %307 = vector.load %arg5[%c76_229, %c0_230] : memref<128x32xf32, #tpu.memory_space<vmem>>, vector<1x32xf32>
    tpu.vector_store %arg5[%c76_229, %c0_230], %306 {strides = array<i32>} : memref<128x32xf32, #tpu.memory_space<vmem>>, vector<1x32xf32>,
    %c77 = arith.constant 77 : index
    %308 = memref.load %arg0[%c77] : memref<128xi32, #tpu.memory_space<smem>>
    %309 = arith.index_cast %308 : i32 to index
    %c0_231 = arith.constant 0 : index
    %310 = vector.load %arg1[%309, %c0_231] : memref<32x32xf32, #tpu.memory_space<vmem>>, vector<1x32xf32>
    %c77_232 = arith.constant 77 : index
    %c0_233 = arith.constant 0 : index
    %311 = vector.load %arg5[%c77_232, %c0_233] : memref<128x32xf32, #tpu.memory_space<vmem>>, vector<1x32xf32>
    tpu.vector_store %arg5[%c77_232, %c0_233], %310 {strides = array<i32>} : memref<128x32xf32, #tpu.memory_space<vmem>>, vector<1x32xf32>,
    %c78 = arith.constant 78 : index
    %312 = memref.load %arg0[%c78] : memref<128xi32, #tpu.memory_space<smem>>
    %313 = arith.index_cast %312 : i32 to index
    %c0_234 = arith.constant 0 : index
    %314 = vector.load %arg1[%313, %c0_234] : memref<32x32xf32, #tpu.memory_space<vmem>>, vector<1x32xf32>
    %c78_235 = arith.constant 78 : index
    %c0_236 = arith.constant 0 : index
    %315 = vector.load %arg5[%c78_235, %c0_236] : memref<128x32xf32, #tpu.memory_space<vmem>>, vector<1x32xf32>
    tpu.vector_store %arg5[%c78_235, %c0_236], %314 {strides = array<i32>} : memref<128x32xf32, #tpu.memory_space<vmem>>, vector<1x32xf32>,
    %c79 = arith.constant 79 : index
    %316 = memref.load %arg0[%c79] : memref<128xi32, #tpu.memory_space<smem>>
    %317 = arith.index_cast %316 : i32 to index
    %c0_237 = arith.constant 0 : index
    %318 = vector.load %arg1[%317, %c0_237] : memref<32x32xf32, #tpu.memory_space<vmem>>, vector<1x32xf32>
    %c79_238 = arith.constant 79 : index
    %c0_239 = arith.constant 0 : index
    %319 = vector.load %arg5[%c79_238, %c0_239] : memref<128x32xf32, #tpu.memory_space<vmem>>, vector<1x32xf32>
    tpu.vector_store %arg5[%c79_238, %c0_239], %318 {strides = array<i32>} : memref<128x32xf32, #tpu.memory_space<vmem>>, vector<1x32xf32>,
    %c80 = arith.constant 80 : index
    %320 = memref.load %arg0[%c80] : memref<128xi32, #tpu.memory_space<smem>>
    %321 = arith.index_cast %320 : i32 to index
    %c0_240 = arith.constant 0 : index
    %322 = vector.load %arg1[%321, %c0_240] : memref<32x32xf32, #tpu.memory_space<vmem>>, vector<1x32xf32>
    %c80_241 = arith.constant 80 : index
    %c0_242 = arith.constant 0 : index
    %323 = vector.load %arg5[%c80_241, %c0_242] : memref<128x32xf32, #tpu.memory_space<vmem>>, vector<1x32xf32>
    tpu.vector_store %arg5[%c80_241, %c0_242], %322 {strides = array<i32>} : memref<128x32xf32, #tpu.memory_space<vmem>>, vector<1x32xf32>,
    %c81 = arith.constant 81 : index
    %324 = memref.load %arg0[%c81] : memref<128xi32, #tpu.memory_space<smem>>
    %325 = arith.index_cast %324 : i32 to index
    %c0_243 = arith.constant 0 : index
    %326 = vector.load %arg1[%325, %c0_243] : memref<32x32xf32, #tpu.memory_space<vmem>>, vector<1x32xf32>
    %c81_244 = arith.constant 81 : index
    %c0_245 = arith.constant 0 : index
    %327 = vector.load %arg5[%c81_244, %c0_245] : memref<128x32xf32, #tpu.memory_space<vmem>>, vector<1x32xf32>
    tpu.vector_store %arg5[%c81_244, %c0_245], %326 {strides = array<i32>} : memref<128x32xf32, #tpu.memory_space<vmem>>, vector<1x32xf32>,
    %c82 = arith.constant 82 : index
    %328 = memref.load %arg0[%c82] : memref<128xi32, #tpu.memory_space<smem>>
    %329 = arith.index_cast %328 : i32 to index
    %c0_246 = arith.constant 0 : index
    %330 = vector.load %arg1[%329, %c0_246] : memref<32x32xf32, #tpu.memory_space<vmem>>, vector<1x32xf32>
    %c82_247 = arith.constant 82 : index
    %c0_248 = arith.constant 0 : index
    %331 = vector.load %arg5[%c82_247, %c0_248] : memref<128x32xf32, #tpu.memory_space<vmem>>, vector<1x32xf32>
    tpu.vector_store %arg5[%c82_247, %c0_248], %330 {strides = array<i32>} : memref<128x32xf32, #tpu.memory_space<vmem>>, vector<1x32xf32>,
    %c83 = arith.constant 83 : index
    %332 = memref.load %arg0[%c83] : memref<128xi32, #tpu.memory_space<smem>>
    %333 = arith.index_cast %332 : i32 to index
    %c0_249 = arith.constant 0 : index
    %334 = vector.load %arg1[%333, %c0_249] : memref<32x32xf32, #tpu.memory_space<vmem>>, vector<1x32xf32>
    %c83_250 = arith.constant 83 : index
    %c0_251 = arith.constant 0 : index
    %335 = vector.load %arg5[%c83_250, %c0_251] : memref<128x32xf32, #tpu.memory_space<vmem>>, vector<1x32xf32>
    tpu.vector_store %arg5[%c83_250, %c0_251], %334 {strides = array<i32>} : memref<128x32xf32, #tpu.memory_space<vmem>>, vector<1x32xf32>,
    %c84 = arith.constant 84 : index
    %336 = memref.load %arg0[%c84] : memref<128xi32, #tpu.memory_space<smem>>
    %337 = arith.index_cast %336 : i32 to index
    %c0_252 = arith.constant 0 : index
    %338 = vector.load %arg1[%337, %c0_252] : memref<32x32xf32, #tpu.memory_space<vmem>>, vector<1x32xf32>
    %c84_253 = arith.constant 84 : index
    %c0_254 = arith.constant 0 : index
    %339 = vector.load %arg5[%c84_253, %c0_254] : memref<128x32xf32, #tpu.memory_space<vmem>>, vector<1x32xf32>
    tpu.vector_store %arg5[%c84_253, %c0_254], %338 {strides = array<i32>} : memref<128x32xf32, #tpu.memory_space<vmem>>, vector<1x32xf32>,
    %c85 = arith.constant 85 : index
    %340 = memref.load %arg0[%c85] : memref<128xi32, #tpu.memory_space<smem>>
    %341 = arith.index_cast %340 : i32 to index
    %c0_255 = arith.constant 0 : index
    %342 = vector.load %arg1[%341, %c0_255] : memref<32x32xf32, #tpu.memory_space<vmem>>, vector<1x32xf32>
    %c85_256 = arith.constant 85 : index
    %c0_257 = arith.constant 0 : index
    %343 = vector.load %arg5[%c85_256, %c0_257] : memref<128x32xf32, #tpu.memory_space<vmem>>, vector<1x32xf32>
    tpu.vector_store %arg5[%c85_256, %c0_257], %342 {strides = array<i32>} : memref<128x32xf32, #tpu.memory_space<vmem>>, vector<1x32xf32>,
    %c86 = arith.constant 86 : index
    %344 = memref.load %arg0[%c86] : memref<128xi32, #tpu.memory_space<smem>>
    %345 = arith.index_cast %344 : i32 to index
    %c0_258 = arith.constant 0 : index
    %346 = vector.load %arg1[%345, %c0_258] : memref<32x32xf32, #tpu.memory_space<vmem>>, vector<1x32xf32>
    %c86_259 = arith.constant 86 : index
    %c0_260 = arith.constant 0 : index
    %347 = vector.load %arg5[%c86_259, %c0_260] : memref<128x32xf32, #tpu.memory_space<vmem>>, vector<1x32xf32>
    tpu.vector_store %arg5[%c86_259, %c0_260], %346 {strides = array<i32>} : memref<128x32xf32, #tpu.memory_space<vmem>>, vector<1x32xf32>,
    %c87 = arith.constant 87 : index
    %348 = memref.load %arg0[%c87] : memref<128xi32, #tpu.memory_space<smem>>
    %349 = arith.index_cast %348 : i32 to index
    %c0_261 = arith.constant 0 : index
    %350 = vector.load %arg1[%349, %c0_261] : memref<32x32xf32, #tpu.memory_space<vmem>>, vector<1x32xf32>
    %c87_262 = arith.constant 87 : index
    %c0_263 = arith.constant 0 : index
    %351 = vector.load %arg5[%c87_262, %c0_263] : memref<128x32xf32, #tpu.memory_space<vmem>>, vector<1x32xf32>
    tpu.vector_store %arg5[%c87_262, %c0_263], %350 {strides = array<i32>} : memref<128x32xf32, #tpu.memory_space<vmem>>, vector<1x32xf32>,
    %c88 = arith.constant 88 : index
    %352 = memref.load %arg0[%c88] : memref<128xi32, #tpu.memory_space<smem>>
    %353 = arith.index_cast %352 : i32 to index
    %c0_264 = arith.constant 0 : index
    %354 = vector.load %arg1[%353, %c0_264] : memref<32x32xf32, #tpu.memory_space<vmem>>, vector<1x32xf32>
    %c88_265 = arith.constant 88 : index
    %c0_266 = arith.constant 0 : index
    %355 = vector.load %arg5[%c88_265, %c0_266] : memref<128x32xf32, #tpu.memory_space<vmem>>, vector<1x32xf32>
    tpu.vector_store %arg5[%c88_265, %c0_266], %354 {strides = array<i32>} : memref<128x32xf32, #tpu.memory_space<vmem>>, vector<1x32xf32>,
    %c89 = arith.constant 89 : index
    %356 = memref.load %arg0[%c89] : memref<128xi32, #tpu.memory_space<smem>>
    %357 = arith.index_cast %356 : i32 to index
    %c0_267 = arith.constant 0 : index
    %358 = vector.load %arg1[%357, %c0_267] : memref<32x32xf32, #tpu.memory_space<vmem>>, vector<1x32xf32>
    %c89_268 = arith.constant 89 : index
    %c0_269 = arith.constant 0 : index
    %359 = vector.load %arg5[%c89_268, %c0_269] : memref<128x32xf32, #tpu.memory_space<vmem>>, vector<1x32xf32>
    tpu.vector_store %arg5[%c89_268, %c0_269], %358 {strides = array<i32>} : memref<128x32xf32, #tpu.memory_space<vmem>>, vector<1x32xf32>,
    %c90 = arith.constant 90 : index
    %360 = memref.load %arg0[%c90] : memref<128xi32, #tpu.memory_space<smem>>
    %361 = arith.index_cast %360 : i32 to index
    %c0_270 = arith.constant 0 : index
    %362 = vector.load %arg1[%361, %c0_270] : memref<32x32xf32, #tpu.memory_space<vmem>>, vector<1x32xf32>
    %c90_271 = arith.constant 90 : index
    %c0_272 = arith.constant 0 : index
    %363 = vector.load %arg5[%c90_271, %c0_272] : memref<128x32xf32, #tpu.memory_space<vmem>>, vector<1x32xf32>
    tpu.vector_store %arg5[%c90_271, %c0_272], %362 {strides = array<i32>} : memref<128x32xf32, #tpu.memory_space<vmem>>, vector<1x32xf32>,
    %c91 = arith.constant 91 : index
    %364 = memref.load %arg0[%c91] : memref<128xi32, #tpu.memory_space<smem>>
    %365 = arith.index_cast %364 : i32 to index
    %c0_273 = arith.constant 0 : index
    %366 = vector.load %arg1[%365, %c0_273] : memref<32x32xf32, #tpu.memory_space<vmem>>, vector<1x32xf32>
    %c91_274 = arith.constant 91 : index
    %c0_275 = arith.constant 0 : index
    %367 = vector.load %arg5[%c91_274, %c0_275] : memref<128x32xf32, #tpu.memory_space<vmem>>, vector<1x32xf32>
    tpu.vector_store %arg5[%c91_274, %c0_275], %366 {strides = array<i32>} : memref<128x32xf32, #tpu.memory_space<vmem>>, vector<1x32xf32>,
    %c92 = arith.constant 92 : index
    %368 = memref.load %arg0[%c92] : memref<128xi32, #tpu.memory_space<smem>>
    %369 = arith.index_cast %368 : i32 to index
    %c0_276 = arith.constant 0 : index
    %370 = vector.load %arg1[%369, %c0_276] : memref<32x32xf32, #tpu.memory_space<vmem>>, vector<1x32xf32>
    %c92_277 = arith.constant 92 : index
    %c0_278 = arith.constant 0 : index
    %371 = vector.load %arg5[%c92_277, %c0_278] : memref<128x32xf32, #tpu.memory_space<vmem>>, vector<1x32xf32>
    tpu.vector_store %arg5[%c92_277, %c0_278], %370 {strides = array<i32>} : memref<128x32xf32, #tpu.memory_space<vmem>>, vector<1x32xf32>,
    %c93 = arith.constant 93 : index
    %372 = memref.load %arg0[%c93] : memref<128xi32, #tpu.memory_space<smem>>
    %373 = arith.index_cast %372 : i32 to index
    %c0_279 = arith.constant 0 : index
    %374 = vector.load %arg1[%373, %c0_279] : memref<32x32xf32, #tpu.memory_space<vmem>>, vector<1x32xf32>
    %c93_280 = arith.constant 93 : index
    %c0_281 = arith.constant 0 : index
    %375 = vector.load %arg5[%c93_280, %c0_281] : memref<128x32xf32, #tpu.memory_space<vmem>>, vector<1x32xf32>
    tpu.vector_store %arg5[%c93_280, %c0_281], %374 {strides = array<i32>} : memref<128x32xf32, #tpu.memory_space<vmem>>, vector<1x32xf32>,
    %c94 = arith.constant 94 : index
    %376 = memref.load %arg0[%c94] : memref<128xi32, #tpu.memory_space<smem>>
    %377 = arith.index_cast %376 : i32 to index
    %c0_282 = arith.constant 0 : index
    %378 = vector.load %arg1[%377, %c0_282] : memref<32x32xf32, #tpu.memory_space<vmem>>, vector<1x32xf32>
    %c94_283 = arith.constant 94 : index
    %c0_284 = arith.constant 0 : index
    %379 = vector.load %arg5[%c94_283, %c0_284] : memref<128x32xf32, #tpu.memory_space<vmem>>, vector<1x32xf32>
    tpu.vector_store %arg5[%c94_283, %c0_284], %378 {strides = array<i32>} : memref<128x32xf32, #tpu.memory_space<vmem>>, vector<1x32xf32>,
    %c95 = arith.constant 95 : index
    %380 = memref.load %arg0[%c95] : memref<128xi32, #tpu.memory_space<smem>>
    %381 = arith.index_cast %380 : i32 to index
    %c0_285 = arith.constant 0 : index
    %382 = vector.load %arg1[%381, %c0_285] : memref<32x32xf32, #tpu.memory_space<vmem>>, vector<1x32xf32>
    %c95_286 = arith.constant 95 : index
    %c0_287 = arith.constant 0 : index
    %383 = vector.load %arg5[%c95_286, %c0_287] : memref<128x32xf32, #tpu.memory_space<vmem>>, vector<1x32xf32>
    tpu.vector_store %arg5[%c95_286, %c0_287], %382 {strides = array<i32>} : memref<128x32xf32, #tpu.memory_space<vmem>>, vector<1x32xf32>,
    %c96 = arith.constant 96 : index
    %384 = memref.load %arg0[%c96] : memref<128xi32, #tpu.memory_space<smem>>
    %385 = arith.index_cast %384 : i32 to index
    %c0_288 = arith.constant 0 : index
    %386 = vector.load %arg1[%385, %c0_288] : memref<32x32xf32, #tpu.memory_space<vmem>>, vector<1x32xf32>
    %c96_289 = arith.constant 96 : index
    %c0_290 = arith.constant 0 : index
    %387 = vector.load %arg5[%c96_289, %c0_290] : memref<128x32xf32, #tpu.memory_space<vmem>>, vector<1x32xf32>
    tpu.vector_store %arg5[%c96_289, %c0_290], %386 {strides = array<i32>} : memref<128x32xf32, #tpu.memory_space<vmem>>, vector<1x32xf32>,
    %c97 = arith.constant 97 : index
    %388 = memref.load %arg0[%c97] : memref<128xi32, #tpu.memory_space<smem>>
    %389 = arith.index_cast %388 : i32 to index
    %c0_291 = arith.constant 0 : index
    %390 = vector.load %arg1[%389, %c0_291] : memref<32x32xf32, #tpu.memory_space<vmem>>, vector<1x32xf32>
    %c97_292 = arith.constant 97 : index
    %c0_293 = arith.constant 0 : index
    %391 = vector.load %arg5[%c97_292, %c0_293] : memref<128x32xf32, #tpu.memory_space<vmem>>, vector<1x32xf32>
    tpu.vector_store %arg5[%c97_292, %c0_293], %390 {strides = array<i32>} : memref<128x32xf32, #tpu.memory_space<vmem>>, vector<1x32xf32>,
    %c98 = arith.constant 98 : index
    %392 = memref.load %arg0[%c98] : memref<128xi32, #tpu.memory_space<smem>>
    %393 = arith.index_cast %392 : i32 to index
    %c0_294 = arith.constant 0 : index
    %394 = vector.load %arg1[%393, %c0_294] : memref<32x32xf32, #tpu.memory_space<vmem>>, vector<1x32xf32>
    %c98_295 = arith.constant 98 : index
    %c0_296 = arith.constant 0 : index
    %395 = vector.load %arg5[%c98_295, %c0_296] : memref<128x32xf32, #tpu.memory_space<vmem>>, vector<1x32xf32>
    tpu.vector_store %arg5[%c98_295, %c0_296], %394 {strides = array<i32>} : memref<128x32xf32, #tpu.memory_space<vmem>>, vector<1x32xf32>,
    %c99 = arith.constant 99 : index
    %396 = memref.load %arg0[%c99] : memref<128xi32, #tpu.memory_space<smem>>
    %397 = arith.index_cast %396 : i32 to index
    %c0_297 = arith.constant 0 : index
    %398 = vector.load %arg1[%397, %c0_297] : memref<32x32xf32, #tpu.memory_space<vmem>>, vector<1x32xf32>
    %c99_298 = arith.constant 99 : index
    %c0_299 = arith.constant 0 : index
    %399 = vector.load %arg5[%c99_298, %c0_299] : memref<128x32xf32, #tpu.memory_space<vmem>>, vector<1x32xf32>
    tpu.vector_store %arg5[%c99_298, %c0_299], %398 {strides = array<i32>} : memref<128x32xf32, #tpu.memory_space<vmem>>, vector<1x32xf32>,
    %c100 = arith.constant 100 : index
    %400 = memref.load %arg0[%c100] : memref<128xi32, #tpu.memory_space<smem>>
    %401 = arith.index_cast %400 : i32 to index
    %c0_300 = arith.constant 0 : index
    %402 = vector.load %arg1[%401, %c0_300] : memref<32x32xf32, #tpu.memory_space<vmem>>, vector<1x32xf32>
    %c100_301 = arith.constant 100 : index
    %c0_302 = arith.constant 0 : index
    %403 = vector.load %arg5[%c100_301, %c0_302] : memref<128x32xf32, #tpu.memory_space<vmem>>, vector<1x32xf32>
    tpu.vector_store %arg5[%c100_301, %c0_302], %402 {strides = array<i32>} : memref<128x32xf32, #tpu.memory_space<vmem>>, vector<1x32xf32>,
    %c101 = arith.constant 101 : index
    %404 = memref.load %arg0[%c101] : memref<128xi32, #tpu.memory_space<smem>>
    %405 = arith.index_cast %404 : i32 to index
    %c0_303 = arith.constant 0 : index
    %406 = vector.load %arg1[%405, %c0_303] : memref<32x32xf32, #tpu.memory_space<vmem>>, vector<1x32xf32>
    %c101_304 = arith.constant 101 : index
    %c0_305 = arith.constant 0 : index
    %407 = vector.load %arg5[%c101_304, %c0_305] : memref<128x32xf32, #tpu.memory_space<vmem>>, vector<1x32xf32>
    tpu.vector_store %arg5[%c101_304, %c0_305], %406 {strides = array<i32>} : memref<128x32xf32, #tpu.memory_space<vmem>>, vector<1x32xf32>,
    %c102 = arith.constant 102 : index
    %408 = memref.load %arg0[%c102] : memref<128xi32, #tpu.memory_space<smem>>
    %409 = arith.index_cast %408 : i32 to index
    %c0_306 = arith.constant 0 : index
    %410 = vector.load %arg1[%409, %c0_306] : memref<32x32xf32, #tpu.memory_space<vmem>>, vector<1x32xf32>
    %c102_307 = arith.constant 102 : index
    %c0_308 = arith.constant 0 : index
    %411 = vector.load %arg5[%c102_307, %c0_308] : memref<128x32xf32, #tpu.memory_space<vmem>>, vector<1x32xf32>
    tpu.vector_store %arg5[%c102_307, %c0_308], %410 {strides = array<i32>} : memref<128x32xf32, #tpu.memory_space<vmem>>, vector<1x32xf32>,
    %c103 = arith.constant 103 : index
    %412 = memref.load %arg0[%c103] : memref<128xi32, #tpu.memory_space<smem>>
    %413 = arith.index_cast %412 : i32 to index
    %c0_309 = arith.constant 0 : index
    %414 = vector.load %arg1[%413, %c0_309] : memref<32x32xf32, #tpu.memory_space<vmem>>, vector<1x32xf32>
    %c103_310 = arith.constant 103 : index
    %c0_311 = arith.constant 0 : index
    %415 = vector.load %arg5[%c103_310, %c0_311] : memref<128x32xf32, #tpu.memory_space<vmem>>, vector<1x32xf32>
    tpu.vector_store %arg5[%c103_310, %c0_311], %414 {strides = array<i32>} : memref<128x32xf32, #tpu.memory_space<vmem>>, vector<1x32xf32>,
    %c104 = arith.constant 104 : index
    %416 = memref.load %arg0[%c104] : memref<128xi32, #tpu.memory_space<smem>>
    %417 = arith.index_cast %416 : i32 to index
    %c0_312 = arith.constant 0 : index
    %418 = vector.load %arg1[%417, %c0_312] : memref<32x32xf32, #tpu.memory_space<vmem>>, vector<1x32xf32>
    %c104_313 = arith.constant 104 : index
    %c0_314 = arith.constant 0 : index
    %419 = vector.load %arg5[%c104_313, %c0_314] : memref<128x32xf32, #tpu.memory_space<vmem>>, vector<1x32xf32>
    tpu.vector_store %arg5[%c104_313, %c0_314], %418 {strides = array<i32>} : memref<128x32xf32, #tpu.memory_space<vmem>>, vector<1x32xf32>,
    %c105 = arith.constant 105 : index
    %420 = memref.load %arg0[%c105] : memref<128xi32, #tpu.memory_space<smem>>
    %421 = arith.index_cast %420 : i32 to index
    %c0_315 = arith.constant 0 : index
    %422 = vector.load %arg1[%421, %c0_315] : memref<32x32xf32, #tpu.memory_space<vmem>>, vector<1x32xf32>
    %c105_316 = arith.constant 105 : index
    %c0_317 = arith.constant 0 : index
    %423 = vector.load %arg5[%c105_316, %c0_317] : memref<128x32xf32, #tpu.memory_space<vmem>>, vector<1x32xf32>
    tpu.vector_store %arg5[%c105_316, %c0_317], %422 {strides = array<i32>} : memref<128x32xf32, #tpu.memory_space<vmem>>, vector<1x32xf32>,
    %c106 = arith.constant 106 : index
    %424 = memref.load %arg0[%c106] : memref<128xi32, #tpu.memory_space<smem>>
    %425 = arith.index_cast %424 : i32 to index
    %c0_318 = arith.constant 0 : index
    %426 = vector.load %arg1[%425, %c0_318] : memref<32x32xf32, #tpu.memory_space<vmem>>, vector<1x32xf32>
    %c106_319 = arith.constant 106 : index
    %c0_320 = arith.constant 0 : index
    %427 = vector.load %arg5[%c106_319, %c0_320] : memref<128x32xf32, #tpu.memory_space<vmem>>, vector<1x32xf32>
    tpu.vector_store %arg5[%c106_319, %c0_320], %426 {strides = array<i32>} : memref<128x32xf32, #tpu.memory_space<vmem>>, vector<1x32xf32>,
    %c107 = arith.constant 107 : index
    %428 = memref.load %arg0[%c107] : memref<128xi32, #tpu.memory_space<smem>>
    %429 = arith.index_cast %428 : i32 to index
    %c0_321 = arith.constant 0 : index
    %430 = vector.load %arg1[%429, %c0_321] : memref<32x32xf32, #tpu.memory_space<vmem>>, vector<1x32xf32>
    %c107_322 = arith.constant 107 : index
    %c0_323 = arith.constant 0 : index
    %431 = vector.load %arg5[%c107_322, %c0_323] : memref<128x32xf32, #tpu.memory_space<vmem>>, vector<1x32xf32>
    tpu.vector_store %arg5[%c107_322, %c0_323], %430 {strides = array<i32>} : memref<128x32xf32, #tpu.memory_space<vmem>>, vector<1x32xf32>,
    %c108 = arith.constant 108 : index
    %432 = memref.load %arg0[%c108] : memref<128xi32, #tpu.memory_space<smem>>
    %433 = arith.index_cast %432 : i32 to index
    %c0_324 = arith.constant 0 : index
    %434 = vector.load %arg1[%433, %c0_324] : memref<32x32xf32, #tpu.memory_space<vmem>>, vector<1x32xf32>
    %c108_325 = arith.constant 108 : index
    %c0_326 = arith.constant 0 : index
    %435 = vector.load %arg5[%c108_325, %c0_326] : memref<128x32xf32, #tpu.memory_space<vmem>>, vector<1x32xf32>
    tpu.vector_store %arg5[%c108_325, %c0_326], %434 {strides = array<i32>} : memref<128x32xf32, #tpu.memory_space<vmem>>, vector<1x32xf32>,
    %c109 = arith.constant 109 : index
    %436 = memref.load %arg0[%c109] : memref<128xi32, #tpu.memory_space<smem>>
    %437 = arith.index_cast %436 : i32 to index
    %c0_327 = arith.constant 0 : index
    %438 = vector.load %arg1[%437, %c0_327] : memref<32x32xf32, #tpu.memory_space<vmem>>, vector<1x32xf32>
    %c109_328 = arith.constant 109 : index
    %c0_329 = arith.constant 0 : index
    %439 = vector.load %arg5[%c109_328, %c0_329] : memref<128x32xf32, #tpu.memory_space<vmem>>, vector<1x32xf32>
    tpu.vector_store %arg5[%c109_328, %c0_329], %438 {strides = array<i32>} : memref<128x32xf32, #tpu.memory_space<vmem>>, vector<1x32xf32>,
    %c110 = arith.constant 110 : index
    %440 = memref.load %arg0[%c110] : memref<128xi32, #tpu.memory_space<smem>>
    %441 = arith.index_cast %440 : i32 to index
    %c0_330 = arith.constant 0 : index
    %442 = vector.load %arg1[%441, %c0_330] : memref<32x32xf32, #tpu.memory_space<vmem>>, vector<1x32xf32>
    %c110_331 = arith.constant 110 : index
    %c0_332 = arith.constant 0 : index
    %443 = vector.load %arg5[%c110_331, %c0_332] : memref<128x32xf32, #tpu.memory_space<vmem>>, vector<1x32xf32>
    tpu.vector_store %arg5[%c110_331, %c0_332], %442 {strides = array<i32>} : memref<128x32xf32, #tpu.memory_space<vmem>>, vector<1x32xf32>,
    %c111 = arith.constant 111 : index
    %444 = memref.load %arg0[%c111] : memref<128xi32, #tpu.memory_space<smem>>
    %445 = arith.index_cast %444 : i32 to index
    %c0_333 = arith.constant 0 : index
    %446 = vector.load %arg1[%445, %c0_333] : memref<32x32xf32, #tpu.memory_space<vmem>>, vector<1x32xf32>
    %c111_334 = arith.constant 111 : index
    %c0_335 = arith.constant 0 : index
    %447 = vector.load %arg5[%c111_334, %c0_335] : memref<128x32xf32, #tpu.memory_space<vmem>>, vector<1x32xf32>
    tpu.vector_store %arg5[%c111_334, %c0_335], %446 {strides = array<i32>} : memref<128x32xf32, #tpu.memory_space<vmem>>, vector<1x32xf32>,
    %c112 = arith.constant 112 : index
    %448 = memref.load %arg0[%c112] : memref<128xi32, #tpu.memory_space<smem>>
    %449 = arith.index_cast %448 : i32 to index
    %c0_336 = arith.constant 0 : index
    %450 = vector.load %arg1[%449, %c0_336] : memref<32x32xf32, #tpu.memory_space<vmem>>, vector<1x32xf32>
    %c112_337 = arith.constant 112 : index
    %c0_338 = arith.constant 0 : index
    %451 = vector.load %arg5[%c112_337, %c0_338] : memref<128x32xf32, #tpu.memory_space<vmem>>, vector<1x32xf32>
    tpu.vector_store %arg5[%c112_337, %c0_338], %450 {strides = array<i32>} : memref<128x32xf32, #tpu.memory_space<vmem>>, vector<1x32xf32>,
    %c113 = arith.constant 113 : index
    %452 = memref.load %arg0[%c113] : memref<128xi32, #tpu.memory_space<smem>>
    %453 = arith.index_cast %452 : i32 to index
    %c0_339 = arith.constant 0 : index
    %454 = vector.load %arg1[%453, %c0_339] : memref<32x32xf32, #tpu.memory_space<vmem>>, vector<1x32xf32>
    %c113_340 = arith.constant 113 : index
    %c0_341 = arith.constant 0 : index
    %455 = vector.load %arg5[%c113_340, %c0_341] : memref<128x32xf32, #tpu.memory_space<vmem>>, vector<1x32xf32>
    tpu.vector_store %arg5[%c113_340, %c0_341], %454 {strides = array<i32>} : memref<128x32xf32, #tpu.memory_space<vmem>>, vector<1x32xf32>,
    %c114 = arith.constant 114 : index
    %456 = memref.load %arg0[%c114] : memref<128xi32, #tpu.memory_space<smem>>
    %457 = arith.index_cast %456 : i32 to index
    %c0_342 = arith.constant 0 : index
    %458 = vector.load %arg1[%457, %c0_342] : memref<32x32xf32, #tpu.memory_space<vmem>>, vector<1x32xf32>
    %c114_343 = arith.constant 114 : index
    %c0_344 = arith.constant 0 : index
    %459 = vector.load %arg5[%c114_343, %c0_344] : memref<128x32xf32, #tpu.memory_space<vmem>>, vector<1x32xf32>
    tpu.vector_store %arg5[%c114_343, %c0_344], %458 {strides = array<i32>} : memref<128x32xf32, #tpu.memory_space<vmem>>, vector<1x32xf32>,
    %c115 = arith.constant 115 : index
    %460 = memref.load %arg0[%c115] : memref<128xi32, #tpu.memory_space<smem>>
    %461 = arith.index_cast %460 : i32 to index
    %c0_345 = arith.constant 0 : index
    %462 = vector.load %arg1[%461, %c0_345] : memref<32x32xf32, #tpu.memory_space<vmem>>, vector<1x32xf32>
    %c115_346 = arith.constant 115 : index
    %c0_347 = arith.constant 0 : index
    %463 = vector.load %arg5[%c115_346, %c0_347] : memref<128x32xf32, #tpu.memory_space<vmem>>, vector<1x32xf32>
    tpu.vector_store %arg5[%c115_346, %c0_347], %462 {strides = array<i32>} : memref<128x32xf32, #tpu.memory_space<vmem>>, vector<1x32xf32>,
    %c116 = arith.constant 116 : index
    %464 = memref.load %arg0[%c116] : memref<128xi32, #tpu.memory_space<smem>>
    %465 = arith.index_cast %464 : i32 to index
    %c0_348 = arith.constant 0 : index
    %466 = vector.load %arg1[%465, %c0_348] : memref<32x32xf32, #tpu.memory_space<vmem>>, vector<1x32xf32>
    %c116_349 = arith.constant 116 : index
    %c0_350 = arith.constant 0 : index
    %467 = vector.load %arg5[%c116_349, %c0_350] : memref<128x32xf32, #tpu.memory_space<vmem>>, vector<1x32xf32>
    tpu.vector_store %arg5[%c116_349, %c0_350], %466 {strides = array<i32>} : memref<128x32xf32, #tpu.memory_space<vmem>>, vector<1x32xf32>,
    %c117 = arith.constant 117 : index
    %468 = memref.load %arg0[%c117] : memref<128xi32, #tpu.memory_space<smem>>
    %469 = arith.index_cast %468 : i32 to index
    %c0_351 = arith.constant 0 : index
    %470 = vector.load %arg1[%469, %c0_351] : memref<32x32xf32, #tpu.memory_space<vmem>>, vector<1x32xf32>
    %c117_352 = arith.constant 117 : index
    %c0_353 = arith.constant 0 : index
    %471 = vector.load %arg5[%c117_352, %c0_353] : memref<128x32xf32, #tpu.memory_space<vmem>>, vector<1x32xf32>
    tpu.vector_store %arg5[%c117_352, %c0_353], %470 {strides = array<i32>} : memref<128x32xf32, #tpu.memory_space<vmem>>, vector<1x32xf32>,
    %c118 = arith.constant 118 : index
    %472 = memref.load %arg0[%c118] : memref<128xi32, #tpu.memory_space<smem>>
    %473 = arith.index_cast %472 : i32 to index
    %c0_354 = arith.constant 0 : index
    %474 = vector.load %arg1[%473, %c0_354] : memref<32x32xf32, #tpu.memory_space<vmem>>, vector<1x32xf32>
    %c118_355 = arith.constant 118 : index
    %c0_356 = arith.constant 0 : index
    %475 = vector.load %arg5[%c118_355, %c0_356] : memref<128x32xf32, #tpu.memory_space<vmem>>, vector<1x32xf32>
    tpu.vector_store %arg5[%c118_355, %c0_356], %474 {strides = array<i32>} : memref<128x32xf32, #tpu.memory_space<vmem>>, vector<1x32xf32>,
    %c119 = arith.constant 119 : index
    %476 = memref.load %arg0[%c119] : memref<128xi32, #tpu.memory_space<smem>>
    %477 = arith.index_cast %476 : i32 to index
    %c0_357 = arith.constant 0 : index
    %478 = vector.load %arg1[%477, %c0_357] : memref<32x32xf32, #tpu.memory_space<vmem>>, vector<1x32xf32>
    %c119_358 = arith.constant 119 : index
    %c0_359 = arith.constant 0 : index
    %479 = vector.load %arg5[%c119_358, %c0_359] : memref<128x32xf32, #tpu.memory_space<vmem>>, vector<1x32xf32>
    tpu.vector_store %arg5[%c119_358, %c0_359], %478 {strides = array<i32>} : memref<128x32xf32, #tpu.memory_space<vmem>>, vector<1x32xf32>,
    %c120 = arith.constant 120 : index
    %480 = memref.load %arg0[%c120] : memref<128xi32, #tpu.memory_space<smem>>
    %481 = arith.index_cast %480 : i32 to index
    %c0_360 = arith.constant 0 : index
    %482 = vector.load %arg1[%481, %c0_360] : memref<32x32xf32, #tpu.memory_space<vmem>>, vector<1x32xf32>
    %c120_361 = arith.constant 120 : index
    %c0_362 = arith.constant 0 : index
    %483 = vector.load %arg5[%c120_361, %c0_362] : memref<128x32xf32, #tpu.memory_space<vmem>>, vector<1x32xf32>
    tpu.vector_store %arg5[%c120_361, %c0_362], %482 {strides = array<i32>} : memref<128x32xf32, #tpu.memory_space<vmem>>, vector<1x32xf32>,
    %c121 = arith.constant 121 : index
    %484 = memref.load %arg0[%c121] : memref<128xi32, #tpu.memory_space<smem>>
    %485 = arith.index_cast %484 : i32 to index
    %c0_363 = arith.constant 0 : index
    %486 = vector.load %arg1[%485, %c0_363] : memref<32x32xf32, #tpu.memory_space<vmem>>, vector<1x32xf32>
    %c121_364 = arith.constant 121 : index
    %c0_365 = arith.constant 0 : index
    %487 = vector.load %arg5[%c121_364, %c0_365] : memref<128x32xf32, #tpu.memory_space<vmem>>, vector<1x32xf32>
    tpu.vector_store %arg5[%c121_364, %c0_365], %486 {strides = array<i32>} : memref<128x32xf32, #tpu.memory_space<vmem>>, vector<1x32xf32>,
    %c122 = arith.constant 122 : index
    %488 = memref.load %arg0[%c122] : memref<128xi32, #tpu.memory_space<smem>>
    %489 = arith.index_cast %488 : i32 to index
    %c0_366 = arith.constant 0 : index
    %490 = vector.load %arg1[%489, %c0_366] : memref<32x32xf32, #tpu.memory_space<vmem>>, vector<1x32xf32>
    %c122_367 = arith.constant 122 : index
    %c0_368 = arith.constant 0 : index
    %491 = vector.load %arg5[%c122_367, %c0_368] : memref<128x32xf32, #tpu.memory_space<vmem>>, vector<1x32xf32>
    tpu.vector_store %arg5[%c122_367, %c0_368], %490 {strides = array<i32>} : memref<128x32xf32, #tpu.memory_space<vmem>>, vector<1x32xf32>,
    %c123 = arith.constant 123 : index
    %492 = memref.load %arg0[%c123] : memref<128xi32, #tpu.memory_space<smem>>
    %493 = arith.index_cast %492 : i32 to index
    %c0_369 = arith.constant 0 : index
    %494 = vector.load %arg1[%493, %c0_369] : memref<32x32xf32, #tpu.memory_space<vmem>>, vector<1x32xf32>
    %c123_370 = arith.constant 123 : index
    %c0_371 = arith.constant 0 : index
    %495 = vector.load %arg5[%c123_370, %c0_371] : memref<128x32xf32, #tpu.memory_space<vmem>>, vector<1x32xf32>
    tpu.vector_store %arg5[%c123_370, %c0_371], %494 {strides = array<i32>} : memref<128x32xf32, #tpu.memory_space<vmem>>, vector<1x32xf32>,
    %c124 = arith.constant 124 : index
    %496 = memref.load %arg0[%c124] : memref<128xi32, #tpu.memory_space<smem>>
    %497 = arith.index_cast %496 : i32 to index
    %c0_372 = arith.constant 0 : index
    %498 = vector.load %arg1[%497, %c0_372] : memref<32x32xf32, #tpu.memory_space<vmem>>, vector<1x32xf32>
    %c124_373 = arith.constant 124 : index
    %c0_374 = arith.constant 0 : index
    %499 = vector.load %arg5[%c124_373, %c0_374] : memref<128x32xf32, #tpu.memory_space<vmem>>, vector<1x32xf32>
    tpu.vector_store %arg5[%c124_373, %c0_374], %498 {strides = array<i32>} : memref<128x32xf32, #tpu.memory_space<vmem>>, vector<1x32xf32>,
    %c125 = arith.constant 125 : index
    %500 = memref.load %arg0[%c125] : memref<128xi32, #tpu.memory_space<smem>>
    %501 = arith.index_cast %500 : i32 to index
    %c0_375 = arith.constant 0 : index
    %502 = vector.load %arg1[%501, %c0_375] : memref<32x32xf32, #tpu.memory_space<vmem>>, vector<1x32xf32>
    %c125_376 = arith.constant 125 : index
    %c0_377 = arith.constant 0 : index
    %503 = vector.load %arg5[%c125_376, %c0_377] : memref<128x32xf32, #tpu.memory_space<vmem>>, vector<1x32xf32>
    tpu.vector_store %arg5[%c125_376, %c0_377], %502 {strides = array<i32>} : memref<128x32xf32, #tpu.memory_space<vmem>>, vector<1x32xf32>,
    %c126 = arith.constant 126 : index
    %504 = memref.load %arg0[%c126] : memref<128xi32, #tpu.memory_space<smem>>
    %505 = arith.index_cast %504 : i32 to index
    %c0_378 = arith.constant 0 : index
    %506 = vector.load %arg1[%505, %c0_378] : memref<32x32xf32, #tpu.memory_space<vmem>>, vector<1x32xf32>
    %c126_379 = arith.constant 126 : index
    %c0_380 = arith.constant 0 : index
    %507 = vector.load %arg5[%c126_379, %c0_380] : memref<128x32xf32, #tpu.memory_space<vmem>>, vector<1x32xf32>
    tpu.vector_store %arg5[%c126_379, %c0_380], %506 {strides = array<i32>} : memref<128x32xf32, #tpu.memory_space<vmem>>, vector<1x32xf32>,
    %c127 = arith.constant 127 : index
    %508 = memref.load %arg0[%c127] : memref<128xi32, #tpu.memory_space<smem>>
    %509 = arith.index_cast %508 : i32 to index
    %c0_381 = arith.constant 0 : index
    %510 = vector.load %arg1[%509, %c0_381] : memref<32x32xf32, #tpu.memory_space<vmem>>, vector<1x32xf32>
    %c127_382 = arith.constant 127 : index
    %c0_383 = arith.constant 0 : index
    %511 = vector.load %arg5[%c127_382, %c0_383] : memref<128x32xf32, #tpu.memory_space<vmem>>, vector<1x32xf32>
    tpu.vector_store %arg5[%c127_382, %c0_383], %510 {strides = array<i32>} : memref<128x32xf32, #tpu.memory_space<vmem>>, vector<1x32xf32>,
    %c0_384 = arith.constant 0 : index
    %c0_385 = arith.constant 0 : index
    %512 = vector.load %arg5[%c0_384, %c0_385] : memref<128x32xf32, #tpu.memory_space<vmem>>, vector<128x32xf32>
    %c0_386 = arith.constant 0 : index
    %c0_387 = arith.constant 0 : index
    %513 = vector.load %arg2[%c0_386, %c0_387] : memref<32x32xf32, #tpu.memory_space<vmem>>, vector<32x32xf32>
    %cst = arith.constant dense<0.000000e+00> : vector<128x32xf32>
    %514 = tpu.matmul %512, %513, %cst {dimension_numbers = #tpu.dot_dimension_numbers<[1], [0], [0], [1], [0, 0, 1, 1], [], []>} : vector<128x32xf32>, vector<32x32xf32>, vector<128x32xf32> -> vector<128x32xf32>
    %c0_388 = arith.constant 0 : index
    %c0_389 = arith.constant 0 : index
    %515 = vector.load %arg3[%c0_388, %c0_389] : memref<1x32xf32, #tpu.memory_space<vmem>>, vector<1x32xf32>
    %516 = vector.broadcast %515 : vector<1x32xf32> to vector<128x32xf32>
    %517 = arith.addf %514, %516 : vector<128x32xf32>
    %518 = vector.extract_strided_slice %517 {offsets = [0, 0], sizes = [8, 32], strides = [1, 1]} : vector<128x32xf32> to vector<8x32xf32>
    %cst_390 = arith.constant dense<0xFF800000> : vector<32xf32>
    %519 = vector.multi_reduction <maximumf>, %518, %cst_390 [0] : vector<8x32xf32> to vector<32xf32>
    %520 = vector.shape_cast %519 : vector<32xf32> to vector<1x32xf32>
    %521 = vector.extract_strided_slice %517 {offsets = [8, 0], sizes = [8, 32], strides = [1, 1]} : vector<128x32xf32> to vector<8x32xf32>
    %cst_391 = arith.constant dense<0xFF800000> : vector<32xf32>
    %522 = vector.multi_reduction <maximumf>, %521, %cst_391 [0] : vector<8x32xf32> to vector<32xf32>
    %523 = vector.shape_cast %522 : vector<32xf32> to vector<1x32xf32>
    %524 = vector.extract_strided_slice %517 {offsets = [16, 0], sizes = [8, 32], strides = [1, 1]} : vector<128x32xf32> to vector<8x32xf32>
    %cst_392 = arith.constant dense<0xFF800000> : vector<32xf32>
    %525 = vector.multi_reduction <maximumf>, %524, %cst_392 [0] : vector<8x32xf32> to vector<32xf32>
    %526 = vector.shape_cast %525 : vector<32xf32> to vector<1x32xf32>
    %527 = vector.extract_strided_slice %517 {offsets = [24, 0], sizes = [8, 32], strides = [1, 1]} : vector<128x32xf32> to vector<8x32xf32>
    %cst_393 = arith.constant dense<0xFF800000> : vector<32xf32>
    %528 = vector.multi_reduction <maximumf>, %527, %cst_393 [0] : vector<8x32xf32> to vector<32xf32>
    %529 = vector.shape_cast %528 : vector<32xf32> to vector<1x32xf32>
    %530 = vector.extract_strided_slice %517 {offsets = [32, 0], sizes = [8, 32], strides = [1, 1]} : vector<128x32xf32> to vector<8x32xf32>
    %cst_394 = arith.constant dense<0xFF800000> : vector<32xf32>
    %531 = vector.multi_reduction <maximumf>, %530, %cst_394 [0] : vector<8x32xf32> to vector<32xf32>
    %532 = vector.shape_cast %531 : vector<32xf32> to vector<1x32xf32>
    %533 = vector.extract_strided_slice %517 {offsets = [40, 0], sizes = [8, 32], strides = [1, 1]} : vector<128x32xf32> to vector<8x32xf32>
    %cst_395 = arith.constant dense<0xFF800000> : vector<32xf32>
    %534 = vector.multi_reduction <maximumf>, %533, %cst_395 [0] : vector<8x32xf32> to vector<32xf32>
    %535 = vector.shape_cast %534 : vector<32xf32> to vector<1x32xf32>
    %536 = vector.extract_strided_slice %517 {offsets = [48, 0], sizes = [8, 32], strides = [1, 1]} : vector<128x32xf32> to vector<8x32xf32>
    %cst_396 = arith.constant dense<0xFF800000> : vector<32xf32>
    %537 = vector.multi_reduction <maximumf>, %536, %cst_396 [0] : vector<8x32xf32> to vector<32xf32>
    %538 = vector.shape_cast %537 : vector<32xf32> to vector<1x32xf32>
    %539 = vector.extract_strided_slice %517 {offsets = [56, 0], sizes = [8, 32], strides = [1, 1]} : vector<128x32xf32> to vector<8x32xf32>
    %cst_397 = arith.constant dense<0xFF800000> : vector<32xf32>
    %540 = vector.multi_reduction <maximumf>, %539, %cst_397 [0] : vector<8x32xf32> to vector<32xf32>
    %541 = vector.shape_cast %540 : vector<32xf32> to vector<1x32xf32>
    %542 = vector.extract_strided_slice %517 {offsets = [64, 0], sizes = [8, 32], strides = [1, 1]} : vector<128x32xf32> to vector<8x32xf32>
    %cst_398 = arith.constant dense<0xFF800000> : vector<32xf32>
    %543 = vector.multi_reduction <maximumf>, %542, %cst_398 [0] : vector<8x32xf32> to vector<32xf32>
    %544 = vector.shape_cast %543 : vector<32xf32> to vector<1x32xf32>
    %545 = vector.extract_strided_slice %517 {offsets = [72, 0], sizes = [8, 32], strides = [1, 1]} : vector<128x32xf32> to vector<8x32xf32>
    %cst_399 = arith.constant dense<0xFF800000> : vector<32xf32>
    %546 = vector.multi_reduction <maximumf>, %545, %cst_399 [0] : vector<8x32xf32> to vector<32xf32>
    %547 = vector.shape_cast %546 : vector<32xf32> to vector<1x32xf32>
    %548 = vector.extract_strided_slice %517 {offsets = [80, 0], sizes = [8, 32], strides = [1, 1]} : vector<128x32xf32> to vector<8x32xf32>
    %cst_400 = arith.constant dense<0xFF800000> : vector<32xf32>
    %549 = vector.multi_reduction <maximumf>, %548, %cst_400 [0] : vector<8x32xf32> to vector<32xf32>
    %550 = vector.shape_cast %549 : vector<32xf32> to vector<1x32xf32>
    %551 = vector.extract_strided_slice %517 {offsets = [88, 0], sizes = [8, 32], strides = [1, 1]} : vector<128x32xf32> to vector<8x32xf32>
    %cst_401 = arith.constant dense<0xFF800000> : vector<32xf32>
    %552 = vector.multi_reduction <maximumf>, %551, %cst_401 [0] : vector<8x32xf32> to vector<32xf32>
    %553 = vector.shape_cast %552 : vector<32xf32> to vector<1x32xf32>
    %554 = vector.extract_strided_slice %517 {offsets = [96, 0], sizes = [8, 32], strides = [1, 1]} : vector<128x32xf32> to vector<8x32xf32>
    %cst_402 = arith.constant dense<0xFF800000> : vector<32xf32>
    %555 = vector.multi_reduction <maximumf>, %554, %cst_402 [0] : vector<8x32xf32> to vector<32xf32>
    %556 = vector.shape_cast %555 : vector<32xf32> to vector<1x32xf32>
    %557 = vector.extract_strided_slice %517 {offsets = [104, 0], sizes = [8, 32], strides = [1, 1]} : vector<128x32xf32> to vector<8x32xf32>
    %cst_403 = arith.constant dense<0xFF800000> : vector<32xf32>
    %558 = vector.multi_reduction <maximumf>, %557, %cst_403 [0] : vector<8x32xf32> to vector<32xf32>
    %559 = vector.shape_cast %558 : vector<32xf32> to vector<1x32xf32>
    %560 = vector.extract_strided_slice %517 {offsets = [112, 0], sizes = [8, 32], strides = [1, 1]} : vector<128x32xf32> to vector<8x32xf32>
    %cst_404 = arith.constant dense<0xFF800000> : vector<32xf32>
    %561 = vector.multi_reduction <maximumf>, %560, %cst_404 [0] : vector<8x32xf32> to vector<32xf32>
    %562 = vector.shape_cast %561 : vector<32xf32> to vector<1x32xf32>
    %563 = vector.extract_strided_slice %517 {offsets = [120, 0], sizes = [8, 32], strides = [1, 1]} : vector<128x32xf32> to vector<8x32xf32>
    %cst_405 = arith.constant dense<0xFF800000> : vector<32xf32>
    %564 = vector.multi_reduction <maximumf>, %563, %cst_405 [0] : vector<8x32xf32> to vector<32xf32>
    %565 = vector.shape_cast %564 : vector<32xf32> to vector<1x32xf32>
    %566 = tpu.concatenate %520, %523, %526, %529, %532, %535, %538, %541, %544, %547, %550, %553, %556, %559, %562, %565 in 0 : vector<1x32xf32>, vector<1x32xf32>, vector<1x32xf32>, vector<1x32xf32>, vector<1x32xf32>, vector<1x32xf32>, vector<1x32xf32>, vector<1x32xf32>, vector<1x32xf32>, vector<1x32xf32>, vector<1x32xf32>, vector<1x32xf32>, vector<1x32xf32>, vector<1x32xf32>, vector<1x32xf32>, vector<1x32xf32> -> vector<16x32xf32>
    %567 = vector.extract_strided_slice %566 {offsets = [0, 0], sizes = [4, 32], strides = [1, 1]} : vector<16x32xf32> to vector<4x32xf32>
    %568 = vector.extract_strided_slice %566 {offsets = [4, 0], sizes = [4, 32], strides = [1, 1]} : vector<16x32xf32> to vector<4x32xf32>
    %569 = vector.extract_strided_slice %566 {offsets = [8, 0], sizes = [4, 32], strides = [1, 1]} : vector<16x32xf32> to vector<4x32xf32>
    %570 = arith.mulf %567, %567 : vector<4x32xf32>
    %cst_406 = arith.constant dense<0.000000e+00> : vector<4xf32>
    %571 = vector.multi_reduction <add>, %570, %cst_406 [1] : vector<4x32xf32> to vector<4xf32>
    %572 = vector.shape_cast %571 : vector<4xf32> to vector<4x1xf32>
    %cst_407 = arith.constant 1.000000e-24 : f32
    %573 = vector.broadcast %cst_407 : f32 to vector<4x1xf32>
    %574 = arith.maximumf %572, %573 : vector<4x1xf32>
    %575 = math.rsqrt %574 : vector<4x1xf32>
    %576 = arith.mulf %568, %568 : vector<4x32xf32>
    %cst_408 = arith.constant dense<0.000000e+00> : vector<4xf32>
    %577 = vector.multi_reduction <add>, %576, %cst_408 [1] : vector<4x32xf32> to vector<4xf32>
    %578 = vector.shape_cast %577 : vector<4xf32> to vector<4x1xf32>
    %cst_409 = arith.constant 1.000000e-24 : f32
    %579 = vector.broadcast %cst_409 : f32 to vector<4x1xf32>
    %580 = arith.maximumf %578, %579 : vector<4x1xf32>
    %581 = math.rsqrt %580 : vector<4x1xf32>
    %582 = arith.mulf %569, %569 : vector<4x32xf32>
    %cst_410 = arith.constant dense<0.000000e+00> : vector<4xf32>
    %583 = vector.multi_reduction <add>, %582, %cst_410 [1] : vector<4x32xf32> to vector<4xf32>
    %584 = vector.shape_cast %583 : vector<4xf32> to vector<4x1xf32>
    %cst_411 = arith.constant 1.000000e-24 : f32
    %585 = vector.broadcast %cst_411 : f32 to vector<4x1xf32>
    %586 = arith.maximumf %584, %585 : vector<4x1xf32>
    %587 = math.rsqrt %586 : vector<4x1xf32>
    %588 = arith.mulf %567, %568 : vector<4x32xf32>
    %cst_412 = arith.constant dense<0.000000e+00> : vector<4xf32>
    %589 = vector.multi_reduction <add>, %588, %cst_412 [1] : vector<4x32xf32> to vector<4xf32>
    %590 = vector.shape_cast %589 : vector<4xf32> to vector<4x1xf32>
    %591 = arith.mulf %575, %581 : vector<4x1xf32>
    %592 = arith.mulf %590, %591 : vector<4x1xf32>
    %593 = arith.mulf %567, %569 : vector<4x32xf32>
    %cst_413 = arith.constant dense<0.000000e+00> : vector<4xf32>
    %594 = vector.multi_reduction <add>, %593, %cst_413 [1] : vector<4x32xf32> to vector<4xf32>
    %595 = vector.shape_cast %594 : vector<4xf32> to vector<4x1xf32>
    %596 = arith.mulf %575, %587 : vector<4x1xf32>
    %597 = arith.mulf %595, %596 : vector<4x1xf32>
    %598 = arith.subf %597, %592 : vector<4x1xf32>
    %cst_414 = arith.constant 1.000000e-01 : f32
    %599 = vector.broadcast %cst_414 : f32 to vector<4x1xf32>
    %600 = arith.addf %598, %599 : vector<4x1xf32>
    %cst_415 = arith.constant 0.000000e+00 : f32
    %601 = vector.broadcast %cst_415 : f32 to vector<4x1xf32>
    %602 = arith.cmpf ogt, %600, %601 : vector<4x1xf32>
    %603 = arith.extui %602 : vector<4x1xi1> to vector<4x1xi32>
    %604 = arith.sitofp %603 : vector<4x1xi32> to vector<4x1xf32>
    %605 = vector.shape_cast %604 : vector<4x1xf32> to vector<1x4x1xf32>
    %cst_416 = arith.constant dense<0.000000e+00> : vector<1xf32>
    %606 = vector.multi_reduction <add>, %605, %cst_416 [1, 2] : vector<1x4x1xf32> to vector<1xf32>
    %607 = vector.shape_cast %606 : vector<1xf32> to vector<1x1x1xf32>
    %608 = vector.extract %607[0, 0, 0] : f32 from vector<1x1x1xf32>
    %cst_417 = arith.constant 0.000000e+00 : f32
    %609 = vector.broadcast %cst_417 : f32 to vector<4x1xf32>
    %610 = arith.select %602, %600, %609 : vector<4x1xi1>, vector<4x1xf32>
    %611 = vector.shape_cast %610 : vector<4x1xf32> to vector<1x4x1xf32>
    %cst_418 = arith.constant dense<0.000000e+00> : vector<1xf32>
    %612 = vector.multi_reduction <add>, %611, %cst_418 [1, 2] : vector<1x4x1xf32> to vector<1xf32>
    %613 = vector.shape_cast %612 : vector<1xf32> to vector<1x1x1xf32>
    %614 = vector.extract %613[0, 0, 0] : f32 from vector<1x1x1xf32>
    %615 = arith.divf %614, %608 : f32
    %c0_419 = arith.constant 0 : index
    %616 = memref.load %arg4[%c0_419] : memref<1xf32, #tpu.memory_space<smem>>
    memref.store %615, %arg4[%c0_419] : memref<1xf32, #tpu.memory_space<smem>>
    return
  }
}

</mosaic_0001>

<llo_original>
// kernel: tpu_custom_call.1
$region0: #{tpu_custom_call.1}
  #allocation0 [shape = 'u32[]', space=smem, size = 0x4, offset = 0x4, fixed_abs, tag = 'smem constant byte address 0x4 - core index']
  #allocation1 [shape = 'u32[144,128]{1,0:T(1,128)}', space=vmem, size = 0x12000, scoped, tag = 'internal scratch']
  #allocation2 [shape = 'f32[128,32]{1,0:T(8,128)}', space=vmem, size = 0x10000, scoped, tag = 'scratch operand']
  %s0 = inlined_call_operand.hbm [shape: s32[128], index: 0, kind: input, shape index: {}]
  %s1 = inlined_call_operand.hbm [shape: f32[32,32], index: 1, kind: input, shape index: {}]
  %s2 = inlined_call_operand.hbm [shape: f32[32,32], index: 2, kind: input, shape index: {}]
  %s3 = inlined_call_operand.vmem [shape: f32[1,32], index: 3, kind: input, shape index: {}]
  %s4 = inlined_call_operand.hbm [shape: f32[1], index: 4, kind: output, shape index: {}]
  %s5 = sld [smem:[#allocation0]]
  $region38: #{tpu_custom_call.1} parent=0
    _
  %s7 = ssub.s32 1, %s5
  %s8 = scalar_select 0, %s7, %s5
  $region1: #{tpu_custom_call.1} parent=0
    #allocation3 [shape = 'u8[512]{0}', space=smem, size = 0x200, scoped, tag = 'input window, operand 0, single buffered']
    #allocation4 [shape = 's32[1]{0}', space=sflag, size = 0x4, scoped, tag = 'scoped memory for tpu_custom_call.1']
    #allocation5 [shape = 's32[1]{0}', space=sflag, size = 0x4, scoped, tag = 'scoped memory for tpu_custom_call.1']
    #allocation6 [shape = 's32[1]{0}', space=sflag, size = 0x4, scoped, tag = 'scoped memory for tpu_custom_call.1']
    #allocation7 [shape = 'u8[16384]{0}', space=vmem, size = 0x4000, scoped, tag = 'input window, operand 1, single buffered']
    #allocation8 [shape = 'u8[16384]{0}', space=vmem, size = 0x4000, scoped, tag = 'input window, operand 2, single buffered']
    #allocation9 [shape = 's32[1]{0}', space=sflag, size = 0x4, scoped, tag = 'scoped memory for tpu_custom_call.1']
    #allocation10 [shape = 'u8[512]{0}', space=smem, size = 0x200, scoped, tag = 'output window, operand 0, single buffered']
    %9 = vsyncpa [#allocation5], 0
    %10 = vsyncpa [#allocation4], 0
    %11 = vsyncpa [#allocation9], 0
    %12 = vsyncpa [#allocation6], 0
    // Predicated region
    $region2: #{tpu_custom_call.1} parent=1 // pred_check
      _
    $region3: #{tpu_custom_call.1} parent=1 // pred_check_branch
      %14 = sbr.rel (0) target = $region5
    $region4: #{tpu_custom_call.1} parent=1 // pred_region
      %s16 = ssub.s32 16, 16
      %17 = vsyncadd [#allocation5], %s16
      %20 = dma.hbm_to_smem %s0, 16, [#allocation3], [#allocation5]
    $region5: #{tpu_custom_call.1} parent=1 // pred_fallthru
      _
    // Predicated region
    $region6: #{tpu_custom_call.1} parent=1 // pred_check
      _
    $region7: #{tpu_custom_call.1} parent=1 // pred_check_branch
      %22 = sbr.rel (0) target = $region9
    $region8: #{tpu_custom_call.1} parent=1 // pred_region
      %s24 = ssub.s32 512, 512
      %25 = vsyncadd [#allocation4], %s24
      %s26 = sshll.u32 [#allocation7], 4
      %s27 = int_to_ptr.vmem [resolvable:$true] %s26
      %32 = dma.hbm_to_vmem [thread:$0]  %s1, 512, %s27, [#allocation4], 128, 128, 8
    $region9: #{tpu_custom_call.1} parent=1 // pred_fallthru
      _
    // Predicated region
    $region10: #{tpu_custom_call.1} parent=1 // pred_check
      _
    $region11: #{tpu_custom_call.1} parent=1 // pred_check_branch
      %34 = sbr.rel (0) target = $region13
    $region12: #{tpu_custom_call.1} parent=1 // pred_region
      %s36 = ssub.s32 512, 512
      %37 = vsyncadd [#allocation9], %s36
      %s38 = sshll.u32 [#allocation8], 4
      %s39 = int_to_ptr.vmem [resolvable:$true] %s38
      %44 = dma.hbm_to_vmem [thread:$0]  %s2, 512, %s39, [#allocation9], 128, 128, 8
    $region13: #{tpu_custom_call.1} parent=1 // pred_fallthru
      _
    // Predicated region
    $region14: #{tpu_custom_call.1} parent=1 // pred_check
      _
    $region15: #{tpu_custom_call.1} parent=1 // pred_check_branch
      %46 = sbr.rel (0) target = $region17
    $region16: #{tpu_custom_call.1} parent=1 // pred_region
      _
    $region17: #{tpu_custom_call.1} parent=1 // pred_fallthru
      _
    // Predicated region
    $region18: #{tpu_custom_call.1} parent=1 // pred_check
      _
    $region19: #{tpu_custom_call.1} parent=1 // pred_check_branch
      %48 = sbr.rel (0) target = $region21
    $region20: #{tpu_custom_call.1} parent=1 // pred_region
      %49 = dma.done [#allocation5], 16
    $region21: #{tpu_custom_call.1} parent=1 // pred_fallthru
      _
    // Predicated region
    $region22: #{tpu_custom_call.1} parent=1 // pred_check
      _
    $region23: #{tpu_custom_call.1} parent=1 // pred_check_branch
      %51 = sbr.rel (0) target = $region25
    $region24: #{tpu_custom_call.1} parent=1 // pred_region
      %52 = dma.done [#allocation4], 512
    $region25: #{tpu_custom_call.1} parent=1 // pred_fallthru
      _
    // Predicated region
    $region26: #{tpu_custom_call.1} parent=1 // pred_check
      _
    $region27: #{tpu_custom_call.1} parent=1 // pred_check_branch
      %54 = sbr.rel (0) target = $region29
    $region28: #{tpu_custom_call.1} parent=1 // pred_region
      %55 = dma.done [#allocation9], 512
    $region29: #{tpu_custom_call.1} parent=1 // pred_fallthru
      _
    %56 = sfence
    %s57 = sld [smem:[#allocation3]]
    %s58 = scalar_lea.vmem [#allocation7], %s57
    %v59 = vld [vmem:[%s58] sm:$0x1]
    %vm60 = vcmask 253952
    %61 = vst.msk [vmem:[#allocation2] sm:$0x1] %vm60, %v59
    %s62 = sld [smem:[#allocation3 + $0x1]]
    %s63 = scalar_lea.vmem [#allocation7], %s62
    %v64 = vld [vmem:[%s63] sm:$0x1]
    %65 = vst.msk [vmem:[#allocation2 + $0x1] sm:$0x1] %vm60, %v64
    %s66 = sld [smem:[#allocation3 + $0x2]]
    %s67 = scalar_lea.vmem [#allocation7], %s66
    %v68 = vld [vmem:[%s67] sm:$0x1]
    %69 = vst.msk [vmem:[#allocation2 + $0x2] sm:$0x1] %vm60, %v68
    %s70 = sld [smem:[#allocation3 + $0x3]]
    %s71 = scalar_lea.vmem [#allocation7], %s70
    %v72 = vld [vmem:[%s71] sm:$0x1]
    %73 = vst.msk [vmem:[#allocation2 + $0x3] sm:$0x1] %vm60, %v72
    %s74 = sld [smem:[#allocation3 + $0x4]]
    %s75 = scalar_lea.vmem [#allocation7], %s74
    %v76 = vld [vmem:[%s75] sm:$0x1]
    %77 = vst.msk [vmem:[#allocation2 + $0x4] sm:$0x1] %vm60, %v76
    %s78 = sld [smem:[#allocation3 + $0x5]]
    %s79 = scalar_lea.vmem [#allocation7], %s78
    %v80 = vld [vmem:[%s79] sm:$0x1]
    %81 = vst.msk [vmem:[#allocation2 + $0x5] sm:$0x1] %vm60, %v80
    %s82 = sld [smem:[#allocation3 + $0x6]]
    %s83 = scalar_lea.vmem [#allocation7], %s82
    %v84 = vld [vmem:[%s83] sm:$0x1]
    %85 = vst.msk [vmem:[#allocation2 + $0x6] sm:$0x1] %vm60, %v84
    %s86 = sld [smem:[#allocation3 + $0x7]]
    %s87 = scalar_lea.vmem [#allocation7], %s86
    %v88 = vld [vmem:[%s87] sm:$0x1]
    %89 = vst.msk [vmem:[#allocation2 + $0x7] sm:$0x1] %vm60, %v88
    %s90 = sld [smem:[#allocation3 + $0x8]]
    %s91 = scalar_lea.vmem [#allocation7], %s90
    %v92 = vld [vmem:[%s91] sm:$0x1]
    %93 = vst.msk [vmem:[#allocation2 + $0x8] sm:$0x1] %vm60, %v92
    %s94 = sld [smem:[#allocation3 + $0x9]]
    %s95 = scalar_lea.vmem [#allocation7], %s94
    %v96 = vld [vmem:[%s95] sm:$0x1]
    %97 = vst.msk [vmem:[#allocation2 + $0x9] sm:$0x1] %vm60, %v96
    %s98 = sld [smem:[#allocation3 + $0xa]]
    %s99 = scalar_lea.vmem [#allocation7], %s98
    %v100 = vld [vmem:[%s99] sm:$0x1]
    %101 = vst.msk [vmem:[#allocation2 + $0xa] sm:$0x1] %vm60, %v100
    %s102 = sld [smem:[#allocation3 + $0xb]]
    %s103 = scalar_lea.vmem [#allocation7], %s102
    %v104 = vld [vmem:[%s103] sm:$0x1]
    %105 = vst.msk [vmem:[#allocation2 + $0xb] sm:$0x1] %vm60, %v104
    %s106 = sld [smem:[#allocation3 + $0xc]]
    %s107 = scalar_lea.vmem [#allocation7], %s106
    %v108 = vld [vmem:[%s107] sm:$0x1]
    %109 = vst.msk [vmem:[#allocation2 + $0xc] sm:$0x1] %vm60, %v108
    %s110 = sld [smem:[#allocation3 + $0xd]]
    %s111 = scalar_lea.vmem [#allocation7], %s110
    %v112 = vld [vmem:[%s111] sm:$0x1]
    %113 = vst.msk [vmem:[#allocation2 + $0xd] sm:$0x1] %vm60, %v112
    %s114 = sld [smem:[#allocation3 + $0xe]]
    %s115 = scalar_lea.vmem [#allocation7], %s114
    %v116 = vld [vmem:[%s115] sm:$0x1]
    %117 = vst.msk [vmem:[#allocation2 + $0xe] sm:$0x1] %vm60, %v116
    %s118 = sld [smem:[#allocation3 + $0xf]]
    %s119 = scalar_lea.vmem [#allocation7], %s118
    %v120 = vld [vmem:[%s119] sm:$0x1]
    %121 = vst.msk [vmem:[#allocation2 + $0xf] sm:$0x1] %vm60, %v120
    %s122 = sld [smem:[#allocation3 + $0x10]]
    %s123 = scalar_lea.vmem [#allocation7], %s122
    %v124 = vld [vmem:[%s123] sm:$0x1]
    %125 = vst.msk [vmem:[#allocation2 + $0x10] sm:$0x1] %vm60, %v124
    %s126 = sld [smem:[#allocation3 + $0x11]]
    %s127 = scalar_lea.vmem [#allocation7], %s126
    %v128 = vld [vmem:[%s127] sm:$0x1]
    %129 = vst.msk [vmem:[#allocation2 + $0x11] sm:$0x1] %vm60, %v128
    %s130 = sld [smem:[#allocation3 + $0x12]]
    %s131 = scalar_lea.vmem [#allocation7], %s130
    %v132 = vld [vmem:[%s131] sm:$0x1]
    %133 = vst.msk [vmem:[#allocation2 + $0x12] sm:$0x1] %vm60, %v132
    %s134 = sld [smem:[#allocation3 + $0x13]]
    %s135 = scalar_lea.vmem [#allocation7], %s134
    %v136 = vld [vmem:[%s135] sm:$0x1]
    %137 = vst.msk [vmem:[#allocation2 + $0x13] sm:$0x1] %vm60, %v136
    %s138 = sld [smem:[#allocation3 + $0x14]]
    %s139 = scalar_lea.vmem [#allocation7], %s138
    %v140 = vld [vmem:[%s139] sm:$0x1]
    %141 = vst.msk [vmem:[#allocation2 + $0x14] sm:$0x1] %vm60, %v140
    %s142 = sld [smem:[#allocation3 + $0x15]]
    %s143 = scalar_lea.vmem [#allocation7], %s142
    %v144 = vld [vmem:[%s143] sm:$0x1]
    %145 = vst.msk [vmem:[#allocation2 + $0x15] sm:$0x1] %vm60, %v144
    %s146 = sld [smem:[#allocation3 + $0x16]]
    %s147 = scalar_lea.vmem [#allocation7], %s146
    %v148 = vld [vmem:[%s147] sm:$0x1]
    %149 = vst.msk [vmem:[#allocation2 + $0x16] sm:$0x1] %vm60, %v148
    %s150 = sld [smem:[#allocation3 + $0x17]]
    %s151 = scalar_lea.vmem [#allocation7], %s150
    %v152 = vld [vmem:[%s151] sm:$0x1]
    %153 = vst.msk [vmem:[#allocation2 + $0x17] sm:$0x1] %vm60, %v152
    %s154 = sld [smem:[#allocation3 + $0x18]]
    %s155 = scalar_lea.vmem [#allocation7], %s154
    %v156 = vld [vmem:[%s155] sm:$0x1]
    %157 = vst.msk [vmem:[#allocation2 + $0x18] sm:$0x1] %vm60, %v156
    %s158 = sld [smem:[#allocation3 + $0x19]]
    %s159 = scalar_lea.vmem [#allocation7], %s158
    %v160 = vld [vmem:[%s159] sm:$0x1]
    %161 = vst.msk [vmem:[#allocation2 + $0x19] sm:$0x1] %vm60, %v160
    %s162 = sld [smem:[#allocation3 + $0x1a]]
    %s163 = scalar_lea.vmem [#allocation7], %s162
    %v164 = vld [vmem:[%s163] sm:$0x1]
    %165 = vst.msk [vmem:[#allocation2 + $0x1a] sm:$0x1] %vm60, %v164
    %s166 = sld [smem:[#allocation3 + $0x1b]]
    %s167 = scalar_lea.vmem [#allocation7], %s166
    %v168 = vld [vmem:[%s167] sm:$0x1]
    %169 = vst.msk [vmem:[#allocation2 + $0x1b] sm:$0x1] %vm60, %v168
    %s170 = sld [smem:[#allocation3 + $0x1c]]
    %s171 = scalar_lea.vmem [#allocation7], %s170
    %v172 = vld [vmem:[%s171] sm:$0x1]
    %173 = vst.msk [vmem:[#allocation2 + $0x1c] sm:$0x1] %vm60, %v172
    %s174 = sld [smem:[#allocation3 + $0x1d]]
    %s175 = scalar_lea.vmem [#allocation7], %s174
    %v176 = vld [vmem:[%s175] sm:$0x1]
    %177 = vst.msk [vmem:[#allocation2 + $0x1d] sm:$0x1] %vm60, %v176
    %s178 = sld [smem:[#allocation3 + $0x1e]]
    %s179 = scalar_lea.vmem [#allocation7], %s178
    %v180 = vld [vmem:[%s179] sm:$0x1]
    %181 = vst.msk [vmem:[#allocation2 + $0x1e] sm:$0x1] %vm60, %v180
    %s182 = sld [smem:[#allocation3 + $0x1f]]
    %s183 = scalar_lea.vmem [#allocation7], %s182
    %v184 = vld [vmem:[%s183] sm:$0x1]
    %185 = vst.msk [vmem:[#allocation2 + $0x1f] sm:$0x1] %vm60, %v184
    %s186 = sld [smem:[#allocation3 + $0x20]]
    %s187 = scalar_lea.vmem [#allocation7], %s186
    %v188 = vld [vmem:[%s187] sm:$0x1]
    %189 = vst.msk [vmem:[#allocation2 + $0x20] sm:$0x1] %vm60, %v188
    %s190 = sld [smem:[#allocation3 + $0x21]]
    %s191 = scalar_lea.vmem [#allocation7], %s190
    %v192 = vld [vmem:[%s191] sm:$0x1]
    %193 = vst.msk [vmem:[#allocation2 + $0x21] sm:$0x1] %vm60, %v192
    %s194 = sld [smem:[#allocation3 + $0x22]]
    %s195 = scalar_lea.vmem [#allocation7], %s194
    %v196 = vld [vmem:[%s195] sm:$0x1]
    %197 = vst.msk [vmem:[#allocation2 + $0x22] sm:$0x1] %vm60, %v196
    %s198 = sld [smem:[#allocation3 + $0x23]]
    %s199 = scalar_lea.vmem [#allocation7], %s198
    %v200 = vld [vmem:[%s199] sm:$0x1]
    %201 = vst.msk [vmem:[#allocation2 + $0x23] sm:$0x1] %vm60, %v200
    %s202 = sld [smem:[#allocation3 + $0x24]]
    %s203 = scalar_lea.vmem [#allocation7], %s202
    %v204 = vld [vmem:[%s203] sm:$0x1]
    %205 = vst.msk [vmem:[#allocation2 + $0x24] sm:$0x1] %vm60, %v204
    %s206 = sld [smem:[#allocation3 + $0x25]]
    %s207 = scalar_lea.vmem [#allocation7], %s206
    %v208 = vld [vmem:[%s207] sm:$0x1]
    %209 = vst.msk [vmem:[#allocation2 + $0x25] sm:$0x1] %vm60, %v208
    %s210 = sld [smem:[#allocation3 + $0x26]]
    %s211 = scalar_lea.vmem [#allocation7], %s210
    %v212 = vld [vmem:[%s211] sm:$0x1]
    %213 = vst.msk [vmem:[#allocation2 + $0x26] sm:$0x1] %vm60, %v212
    %s214 = sld [smem:[#allocation3 + $0x27]]
    %s215 = scalar_lea.vmem [#allocation7], %s214
    %v216 = vld [vmem:[%s215] sm:$0x1]
    %217 = vst.msk [vmem:[#allocation2 + $0x27] sm:$0x1] %vm60, %v216
    %s218 = sld [smem:[#allocation3 + $0x28]]
    %s219 = scalar_lea.vmem [#allocation7], %s218
    %v220 = vld [vmem:[%s219] sm:$0x1]
    %221 = vst.msk [vmem:[#allocation2 + $0x28] sm:$0x1] %vm60, %v220
    %s222 = sld [smem:[#allocation3 + $0x29]]
    %s223 = scalar_lea.vmem [#allocation7], %s222
    %v224 = vld [vmem:[%s223] sm:$0x1]
    %225 = vst.msk [vmem:[#allocation2 + $0x29] sm:$0x1] %vm60, %v224
    %s226 = sld [smem:[#allocation3 + $0x2a]]
    %s227 = scalar_lea.vmem [#allocation7], %s226
    %v228 = vld [vmem:[%s227] sm:$0x1]
    %229 = vst.msk [vmem:[#allocation2 + $0x2a] sm:$0x1] %vm60, %v228
    %s230 = sld [smem:[#allocation3 + $0x2b]]
    %s231 = scalar_lea.vmem [#allocation7], %s230
    %v232 = vld [vmem:[%s231] sm:$0x1]
    %233 = vst.msk [vmem:[#allocation2 + $0x2b] sm:$0x1] %vm60, %v232
    %s234 = sld [smem:[#allocation3 + $0x2c]]
    %s235 = scalar_lea.vmem [#allocation7], %s234
    %v236 = vld [vmem:[%s235] sm:$0x1]
    %237 = vst.msk [vmem:[#allocation2 + $0x2c] sm:$0x1] %vm60, %v236
    %s238 = sld [smem:[#allocation3 + $0x2d]]
    %s239 = scalar_lea.vmem [#allocation7], %s238
    %v240 = vld [vmem:[%s239] sm:$0x1]
    %241 = vst.msk [vmem:[#allocation2 + $0x2d] sm:$0x1] %vm60, %v240
    %s242 = sld [smem:[#allocation3 + $0x2e]]
    %s243 = scalar_lea.vmem [#allocation7], %s242
    %v244 = vld [vmem:[%s243] sm:$0x1]
    %245 = vst.msk [vmem:[#allocation2 + $0x2e] sm:$0x1] %vm60, %v244
    %s246 = sld [smem:[#allocation3 + $0x2f]]
    %s247 = scalar_lea.vmem [#allocation7], %s246
    %v248 = vld [vmem:[%s247] sm:$0x1]
    %249 = vst.msk [vmem:[#allocation2 + $0x2f] sm:$0x1] %vm60, %v248
    %s250 = sld [smem:[#allocation3 + $0x30]]
    %s251 = scalar_lea.vmem [#allocation7], %s250
    %v252 = vld [vmem:[%s251] sm:$0x1]
    %253 = vst.msk [vmem:[#allocation2 + $0x30] sm:$0x1] %vm60, %v252
    %s254 = sld [smem:[#allocation3 + $0x31]]
    %s255 = scalar_lea.vmem [#allocation7], %s254
    %v256 = vld [vmem:[%s255] sm:$0x1]
    %257 = vst.msk [vmem:[#allocation2 + $0x31] sm:$0x1] %vm60, %v256
    %s258 = sld [smem:[#allocation3 + $0x32]]
    %s259 = scalar_lea.vmem [#allocation7], %s258
    %v260 = vld [vmem:[%s259] sm:$0x1]
    %261 = vst.msk [vmem:[#allocation2 + $0x32] sm:$0x1] %vm60, %v260
    %s262 = sld [smem:[#allocation3 + $0x33]]
    %s263 = scalar_lea.vmem [#allocation7], %s262
    %v264 = vld [vmem:[%s263] sm:$0x1]
    %265 = vst.msk [vmem:[#allocation2 + $0x33] sm:$0x1] %vm60, %v264
    %s266 = sld [smem:[#allocation3 + $0x34]]
    %s267 = scalar_lea.vmem [#allocation7], %s266
    %v268 = vld [vmem:[%s267] sm:$0x1]
    %269 = vst.msk [vmem:[#allocation2 + $0x34] sm:$0x1] %vm60, %v268
    %s270 = sld [smem:[#allocation3 + $0x35]]
    %s271 = scalar_lea.vmem [#allocation7], %s270
    %v272 = vld [vmem:[%s271] sm:$0x1]
    %273 = vst.msk [vmem:[#allocation2 + $0x35] sm:$0x1] %vm60, %v272
    %s274 = sld [smem:[#allocation3 + $0x36]]
    %s275 = scalar_lea.vmem [#allocation7], %s274
    %v276 = vld [vmem:[%s275] sm:$0x1]
    %277 = vst.msk [vmem:[#allocation2 + $0x36] sm:$0x1] %vm60, %v276
    %s278 = sld [smem:[#allocation3 + $0x37]]
    %s279 = scalar_lea.vmem [#allocation7], %s278
    %v280 = vld [vmem:[%s279] sm:$0x1]
    %281 = vst.msk [vmem:[#allocation2 + $0x37] sm:$0x1] %vm60, %v280
    %s282 = sld [smem:[#allocation3 + $0x38]]
    %s283 = scalar_lea.vmem [#allocation7], %s282
    %v284 = vld [vmem:[%s283] sm:$0x1]
    %285 = vst.msk [vmem:[#allocation2 + $0x38] sm:$0x1] %vm60, %v284
    %s286 = sld [smem:[#allocation3 + $0x39]]
    %s287 = scalar_lea.vmem [#allocation7], %s286
    %v288 = vld [vmem:[%s287] sm:$0x1]
    %289 = vst.msk [vmem:[#allocation2 + $0x39] sm:$0x1] %vm60, %v288
    %s290 = sld [smem:[#allocation3 + $0x3a]]
    %s291 = scalar_lea.vmem [#allocation7], %s290
    %v292 = vld [vmem:[%s291] sm:$0x1]
    %293 = vst.msk [vmem:[#allocation2 + $0x3a] sm:$0x1] %vm60, %v292
    %s294 = sld [smem:[#allocation3 + $0x3b]]
    %s295 = scalar_lea.vmem [#allocation7], %s294
    %v296 = vld [vmem:[%s295] sm:$0x1]
    %297 = vst.msk [vmem:[#allocation2 + $0x3b] sm:$0x1] %vm60, %v296
    %s298 = sld [smem:[#allocation3 + $0x3c]]
    %s299 = scalar_lea.vmem [#allocation7], %s298
    %v300 = vld [vmem:[%s299] sm:$0x1]
    %301 = vst.msk [vmem:[#allocation2 + $0x3c] sm:$0x1] %vm60, %v300
    %s302 = sld [smem:[#allocation3 + $0x3d]]
    %s303 = scalar_lea.vmem [#allocation7], %s302
    %v304 = vld [vmem:[%s303] sm:$0x1]
    %305 = vst.msk [vmem:[#allocation2 + $0x3d] sm:$0x1] %vm60, %v304
    %s306 = sld [smem:[#allocation3 + $0x3e]]
    %s307 = scalar_lea.vmem [#allocation7], %s306
    %v308 = vld [vmem:[%s307] sm:$0x1]
    %309 = vst.msk [vmem:[#allocation2 + $0x3e] sm:$0x1] %vm60, %v308
    %s310 = sld [smem:[#allocation3 + $0x3f]]
    %s311 = scalar_lea.vmem [#allocation7], %s310
    %v312 = vld [vmem:[%s311] sm:$0x1]
    %313 = vst.msk [vmem:[#allocation2 + $0x3f] sm:$0x1] %vm60, %v312
    %s314 = sld [smem:[#allocation3 + $0x40]]
    %s315 = scalar_lea.vmem [#allocation7], %s314
    %v316 = vld [vmem:[%s315] sm:$0x1]
    %317 = vst.msk [vmem:[#allocation2 + $0x40] sm:$0x1] %vm60, %v316
    %s318 = sld [smem:[#allocation3 + $0x41]]
    %s319 = scalar_lea.vmem [#allocation7], %s318
    %v320 = vld [vmem:[%s319] sm:$0x1]
    %321 = vst.msk [vmem:[#allocation2 + $0x41] sm:$0x1] %vm60, %v320
    %s322 = sld [smem:[#allocation3 + $0x42]]
    %s323 = scalar_lea.vmem [#allocation7], %s322
    %v324 = vld [vmem:[%s323] sm:$0x1]
    %325 = vst.msk [vmem:[#allocation2 + $0x42] sm:$0x1] %vm60, %v324
    %s326 = sld [smem:[#allocation3 + $0x43]]
    %s327 = scalar_lea.vmem [#allocation7], %s326
    %v328 = vld [vmem:[%s327] sm:$0x1]
    %329 = vst.msk [vmem:[#allocation2 + $0x43] sm:$0x1] %vm60, %v328
    %s330 = sld [smem:[#allocation3 + $0x44]]
    %s331 = scalar_lea.vmem [#allocation7], %s330
    %v332 = vld [vmem:[%s331] sm:$0x1]
    %333 = vst.msk [vmem:[#allocation2 + $0x44] sm:$0x1] %vm60, %v332
    %s334 = sld [smem:[#allocation3 + $0x45]]
    %s335 = scalar_lea.vmem [#allocation7], %s334
    %v336 = vld [vmem:[%s335] sm:$0x1]
    %337 = vst.msk [vmem:[#allocation2 + $0x45] sm:$0x1] %vm60, %v336
    %s338 = sld [smem:[#allocation3 + $0x46]]
    %s339 = scalar_lea.vmem [#allocation7], %s338
    %v340 = vld [vmem:[%s339] sm:$0x1]
    %341 = vst.msk [vmem:[#allocation2 + $0x46] sm:$0x1] %vm60, %v340
    %s342 = sld [smem:[#allocation3 + $0x47]]
    %s343 = scalar_lea.vmem [#allocation7], %s342
    %v344 = vld [vmem:[%s343] sm:$0x1]
    %345 = vst.msk [vmem:[#allocation2 + $0x47] sm:$0x1] %vm60, %v344
    %s346 = sld [smem:[#allocation3 + $0x48]]
    %s347 = scalar_lea.vmem [#allocation7], %s346
    %v348 = vld [vmem:[%s347] sm:$0x1]
    %349 = vst.msk [vmem:[#allocation2 + $0x48] sm:$0x1] %vm60, %v348
    %s350 = sld [smem:[#allocation3 + $0x49]]
    %s351 = scalar_lea.vmem [#allocation7], %s350
    %v352 = vld [vmem:[%s351] sm:$0x1]
    %353 = vst.msk [vmem:[#allocation2 + $0x49] sm:$0x1] %vm60, %v352
    %s354 = sld [smem:[#allocation3 + $0x4a]]
    %s355 = scalar_lea.vmem [#allocation7], %s354
    %v356 = vld [vmem:[%s355] sm:$0x1]
    %357 = vst.msk [vmem:[#allocation2 + $0x4a] sm:$0x1] %vm60, %v356
    %s358 = sld [smem:[#allocation3 + $0x4b]]
    %s359 = scalar_lea.vmem [#allocation7], %s358
    %v360 = vld [vmem:[%s359] sm:$0x1]
    %361 = vst.msk [vmem:[#allocation2 + $0x4b] sm:$0x1] %vm60, %v360
    %s362 = sld [smem:[#allocation3 + $0x4c]]
    %s363 = scalar_lea.vmem [#allocation7], %s362
    %v364 = vld [vmem:[%s363] sm:$0x1]
    %365 = vst.msk [vmem:[#allocation2 + $0x4c] sm:$0x1] %vm60, %v364
    %s366 = sld [smem:[#allocation3 + $0x4d]]
    %s367 = scalar_lea.vmem [#allocation7], %s366
    %v368 = vld [vmem:[%s367] sm:$0x1]
    %369 = vst.msk [vmem:[#allocation2 + $0x4d] sm:$0x1] %vm60, %v368
    %s370 = sld [smem:[#allocation3 + $0x4e]]
    %s371 = scalar_lea.vmem [#allocation7], %s370
    %v372 = vld [vmem:[%s371] sm:$0x1]
    %373 = vst.msk [vmem:[#allocation2 + $0x4e] sm:$0x1] %vm60, %v372
    %s374 = sld [smem:[#allocation3 + $0x4f]]
    %s375 = scalar_lea.vmem [#allocation7], %s374
    %v376 = vld [vmem:[%s375] sm:$0x1]
    %377 = vst.msk [vmem:[#allocation2 + $0x4f] sm:$0x1] %vm60, %v376
    %s378 = sld [smem:[#allocation3 + $0x50]]
    %s379 = scalar_lea.vmem [#allocation7], %s378
    %v380 = vld [vmem:[%s379] sm:$0x1]
    %381 = vst.msk [vmem:[#allocation2 + $0x50] sm:$0x1] %vm60, %v380
    %s382 = sld [smem:[#allocation3 + $0x51]]
    %s383 = scalar_lea.vmem [#allocation7], %s382
    %v384 = vld [vmem:[%s383] sm:$0x1]
    %385 = vst.msk [vmem:[#allocation2 + $0x51] sm:$0x1] %vm60, %v384
    %s386 = sld [smem:[#allocation3 + $0x52]]
    %s387 = scalar_lea.vmem [#allocation7], %s386
    %v388 = vld [vmem:[%s387] sm:$0x1]
    %389 = vst.msk [vmem:[#allocation2 + $0x52] sm:$0x1] %vm60, %v388
    %s390 = sld [smem:[#allocation3 + $0x53]]
    %s391 = scalar_lea.vmem [#allocation7], %s390
    %v392 = vld [vmem:[%s391] sm:$0x1]
    %393 = vst.msk [vmem:[#allocation2 + $0x53] sm:$0x1] %vm60, %v392
    %s394 = sld [smem:[#allocation3 + $0x54]]
    %s395 = scalar_lea.vmem [#allocation7], %s394
    %v396 = vld [vmem:[%s395] sm:$0x1]
    %397 = vst.msk [vmem:[#allocation2 + $0x54] sm:$0x1] %vm60, %v396
    %s398 = sld [smem:[#allocation3 + $0x55]]
    %s399 = scalar_lea.vmem [#allocation7], %s398
    %v400 = vld [vmem:[%s399] sm:$0x1]
    %401 = vst.msk [vmem:[#allocation2 + $0x55] sm:$0x1] %vm60, %v400
    %s402 = sld [smem:[#allocation3 + $0x56]]
    %s403 = scalar_lea.vmem [#allocation7], %s402
    %v404 = vld [vmem:[%s403] sm:$0x1]
    %405 = vst.msk [vmem:[#allocation2 + $0x56] sm:$0x1] %vm60, %v404
    %s406 = sld [smem:[#allocation3 + $0x57]]
    %s407 = scalar_lea.vmem [#allocation7], %s406
    %v408 = vld [vmem:[%s407] sm:$0x1]
    %409 = vst.msk [vmem:[#allocation2 + $0x57] sm:$0x1] %vm60, %v408
    %s410 = sld [smem:[#allocation3 + $0x58]]
    %s411 = scalar_lea.vmem [#allocation7], %s410
    %v412 = vld [vmem:[%s411] sm:$0x1]
    %413 = vst.msk [vmem:[#allocation2 + $0x58] sm:$0x1] %vm60, %v412
    %s414 = sld [smem:[#allocation3 + $0x59]]
    %s415 = scalar_lea.vmem [#allocation7], %s414
    %v416 = vld [vmem:[%s415] sm:$0x1]
    %417 = vst.msk [vmem:[#allocation2 + $0x59] sm:$0x1] %vm60, %v416
    %s418 = sld [smem:[#allocation3 + $0x5a]]
    %s419 = scalar_lea.vmem [#allocation7], %s418
    %v420 = vld [vmem:[%s419] sm:$0x1]
    %421 = vst.msk [vmem:[#allocation2 + $0x5a] sm:$0x1] %vm60, %v420
    %s422 = sld [smem:[#allocation3 + $0x5b]]
    %s423 = scalar_lea.vmem [#allocation7], %s422
    %v424 = vld [vmem:[%s423] sm:$0x1]
    %425 = vst.msk [vmem:[#allocation2 + $0x5b] sm:$0x1] %vm60, %v424
    %s426 = sld [smem:[#allocation3 + $0x5c]]
    %s427 = scalar_lea.vmem [#allocation7], %s426
    %v428 = vld [vmem:[%s427] sm:$0x1]
    %429 = vst.msk [vmem:[#allocation2 + $0x5c] sm:$0x1] %vm60, %v428
    %s430 = sld [smem:[#allocation3 + $0x5d]]
    %s431 = scalar_lea.vmem [#allocation7], %s430
    %v432 = vld [vmem:[%s431] sm:$0x1]
    %433 = vst.msk [vmem:[#allocation2 + $0x5d] sm:$0x1] %vm60, %v432
    %s434 = sld [smem:[#allocation3 + $0x5e]]
    %s435 = scalar_lea.vmem [#allocation7], %s434
    %v436 = vld [vmem:[%s435] sm:$0x1]
    %437 = vst.msk [vmem:[#allocation2 + $0x5e] sm:$0x1] %vm60, %v436
    %s438 = sld [smem:[#allocation3 + $0x5f]]
    %s439 = scalar_lea.vmem [#allocation7], %s438
    %v440 = vld [vmem:[%s439] sm:$0x1]
    %441 = vst.msk [vmem:[#allocation2 + $0x5f] sm:$0x1] %vm60, %v440
    %s442 = sld [smem:[#allocation3 + $0x60]]
    %s443 = scalar_lea.vmem [#allocation7], %s442
    %v444 = vld [vmem:[%s443] sm:$0x1]
    %445 = vst.msk [vmem:[#allocation2 + $0x60] sm:$0x1] %vm60, %v444
    %s446 = sld [smem:[#allocation3 + $0x61]]
    %s447 = scalar_lea.vmem [#allocation7], %s446
    %v448 = vld [vmem:[%s447] sm:$0x1]
    %449 = vst.msk [vmem:[#allocation2 + $0x61] sm:$0x1] %vm60, %v448
    %s450 = sld [smem:[#allocation3 + $0x62]]
    %s451 = scalar_lea.vmem [#allocation7], %s450
    %v452 = vld [vmem:[%s451] sm:$0x1]
    %453 = vst.msk [vmem:[#allocation2 + $0x62] sm:$0x1] %vm60, %v452
    %s454 = sld [smem:[#allocation3 + $0x63]]
    %s455 = scalar_lea.vmem [#allocation7], %s454
    %v456 = vld [vmem:[%s455] sm:$0x1]
    %457 = vst.msk [vmem:[#allocation2 + $0x63] sm:$0x1] %vm60, %v456
    %s458 = sld [smem:[#allocation3 + $0x64]]
    %s459 = scalar_lea.vmem [#allocation7], %s458
    %v460 = vld [vmem:[%s459] sm:$0x1]
    %461 = vst.msk [vmem:[#allocation2 + $0x64] sm:$0x1] %vm60, %v460
    %s462 = sld [smem:[#allocation3 + $0x65]]
    %s463 = scalar_lea.vmem [#allocation7], %s462
    %v464 = vld [vmem:[%s463] sm:$0x1]
    %465 = vst.msk [vmem:[#allocation2 + $0x65] sm:$0x1] %vm60, %v464
    %s466 = sld [smem:[#allocation3 + $0x66]]
    %s467 = scalar_lea.vmem [#allocation7], %s466
    %v468 = vld [vmem:[%s467] sm:$0x1]
    %469 = vst.msk [vmem:[#allocation2 + $0x66] sm:$0x1] %vm60, %v468
    %s470 = sld [smem:[#allocation3 + $0x67]]
    %s471 = scalar_lea.vmem [#allocation7], %s470
    %v472 = vld [vmem:[%s471] sm:$0x1]
    %473 = vst.msk [vmem:[#allocation2 + $0x67] sm:$0x1] %vm60, %v472
    %s474 = sld [smem:[#allocation3 + $0x68]]
    %s475 = scalar_lea.vmem [#allocation7], %s474
    %v476 = vld [vmem:[%s475] sm:$0x1]
    %477 = vst.msk [vmem:[#allocation2 + $0x68] sm:$0x1] %vm60, %v476
    %s478 = sld [smem:[#allocation3 + $0x69]]
    %s479 = scalar_lea.vmem [#allocation7], %s478
    %v480 = vld [vmem:[%s479] sm:$0x1]
    %481 = vst.msk [vmem:[#allocation2 + $0x69] sm:$0x1] %vm60, %v480
    %s482 = sld [smem:[#allocation3 + $0x6a]]
    %s483 = scalar_lea.vmem [#allocation7], %s482
    %v484 = vld [vmem:[%s483] sm:$0x1]
    %485 = vst.msk [vmem:[#allocation2 + $0x6a] sm:$0x1] %vm60, %v484
    %s486 = sld [smem:[#allocation3 + $0x6b]]
    %s487 = scalar_lea.vmem [#allocation7], %s486
    %v488 = vld [vmem:[%s487] sm:$0x1]
    %489 = vst.msk [vmem:[#allocation2 + $0x6b] sm:$0x1] %vm60, %v488
    %s490 = sld [smem:[#allocation3 + $0x6c]]
    %s491 = scalar_lea.vmem [#allocation7], %s490
    %v492 = vld [vmem:[%s491] sm:$0x1]
    %493 = vst.msk [vmem:[#allocation2 + $0x6c] sm:$0x1] %vm60, %v492
    %s494 = sld [smem:[#allocation3 + $0x6d]]
    %s495 = scalar_lea.vmem [#allocation7], %s494
    %v496 = vld [vmem:[%s495] sm:$0x1]
    %497 = vst.msk [vmem:[#allocation2 + $0x6d] sm:$0x1] %vm60, %v496
    %s498 = sld [smem:[#allocation3 + $0x6e]]
    %s499 = scalar_lea.vmem [#allocation7], %s498
    %v500 = vld [vmem:[%s499] sm:$0x1]
    %501 = vst.msk [vmem:[#allocation2 + $0x6e] sm:$0x1] %vm60, %v500
    %s502 = sld [smem:[#allocation3 + $0x6f]]
    %s503 = scalar_lea.vmem [#allocation7], %s502
    %v504 = vld [vmem:[%s503] sm:$0x1]
    %505 = vst.msk [vmem:[#allocation2 + $0x6f] sm:$0x1] %vm60, %v504
    %s506 = sld [smem:[#allocation3 + $0x70]]
    %s507 = scalar_lea.vmem [#allocation7], %s506
    %v508 = vld [vmem:[%s507] sm:$0x1]
    %509 = vst.msk [vmem:[#allocation2 + $0x70] sm:$0x1] %vm60, %v508
    %s510 = sld [smem:[#allocation3 + $0x71]]
    %s511 = scalar_lea.vmem [#allocation7], %s510
    %v512 = vld [vmem:[%s511] sm:$0x1]
    %513 = vst.msk [vmem:[#allocation2 + $0x71] sm:$0x1] %vm60, %v512
    %s514 = sld [smem:[#allocation3 + $0x72]]
    %s515 = scalar_lea.vmem [#allocation7], %s514
    %v516 = vld [vmem:[%s515] sm:$0x1]
    %517 = vst.msk [vmem:[#allocation2 + $0x72] sm:$0x1] %vm60, %v516
    %s518 = sld [smem:[#allocation3 + $0x73]]
    %s519 = scalar_lea.vmem [#allocation7], %s518
    %v520 = vld [vmem:[%s519] sm:$0x1]
    %521 = vst.msk [vmem:[#allocation2 + $0x73] sm:$0x1] %vm60, %v520
    %s522 = sld [smem:[#allocation3 + $0x74]]
    %s523 = scalar_lea.vmem [#allocation7], %s522
    %v524 = vld [vmem:[%s523] sm:$0x1]
    %525 = vst.msk [vmem:[#allocation2 + $0x74] sm:$0x1] %vm60, %v524
    %s526 = sld [smem:[#allocation3 + $0x75]]
    %s527 = scalar_lea.vmem [#allocation7], %s526
    %v528 = vld [vmem:[%s527] sm:$0x1]
    %529 = vst.msk [vmem:[#allocation2 + $0x75] sm:$0x1] %vm60, %v528
    %s530 = sld [smem:[#allocation3 + $0x76]]
    %s531 = scalar_lea.vmem [#allocation7], %s530
    %v532 = vld [vmem:[%s531] sm:$0x1]
    %533 = vst.msk [vmem:[#allocation2 + $0x76] sm:$0x1] %vm60, %v532
    %s534 = sld [smem:[#allocation3 + $0x77]]
    %s535 = scalar_lea.vmem [#allocation7], %s534
    %v536 = vld [vmem:[%s535] sm:$0x1]
    %537 = vst.msk [vmem:[#allocation2 + $0x77] sm:$0x1] %vm60, %v536
    %s538 = sld [smem:[#allocation3 + $0x78]]
    %s539 = scalar_lea.vmem [#allocation7], %s538
    %v540 = vld [vmem:[%s539] sm:$0x1]
    %541 = vst.msk [vmem:[#allocation2 + $0x78] sm:$0x1] %vm60, %v540
    %s542 = sld [smem:[#allocation3 + $0x79]]
    %s543 = scalar_lea.vmem [#allocation7], %s542
    %v544 = vld [vmem:[%s543] sm:$0x1]
    %545 = vst.msk [vmem:[#allocation2 + $0x79] sm:$0x1] %vm60, %v544
    %s546 = sld [smem:[#allocation3 + $0x7a]]
    %s547 = scalar_lea.vmem [#allocation7], %s546
    %v548 = vld [vmem:[%s547] sm:$0x1]
    %549 = vst.msk [vmem:[#allocation2 + $0x7a] sm:$0x1] %vm60, %v548
    %s550 = sld [smem:[#allocation3 + $0x7b]]
    %s551 = scalar_lea.vmem [#allocation7], %s550
    %v552 = vld [vmem:[%s551] sm:$0x1]
    %553 = vst.msk [vmem:[#allocation2 + $0x7b] sm:$0x1] %vm60, %v552
    %s554 = sld [smem:[#allocation3 + $0x7c]]
    %s555 = scalar_lea.vmem [#allocation7], %s554
    %v556 = vld [vmem:[%s555] sm:$0x1]
    %557 = vst.msk [vmem:[#allocation2 + $0x7c] sm:$0x1] %vm60, %v556
    %s558 = sld [smem:[#allocation3 + $0x7d]]
    %s559 = scalar_lea.vmem [#allocation7], %s558
    %v560 = vld [vmem:[%s559] sm:$0x1]
    %561 = vst.msk [vmem:[#allocation2 + $0x7d] sm:$0x1] %vm60, %v560
    %s562 = sld [smem:[#allocation3 + $0x7e]]
    %s563 = scalar_lea.vmem [#allocation7], %s562
    %v564 = vld [vmem:[%s563] sm:$0x1]
    %565 = vst.msk [vmem:[#allocation2 + $0x7e] sm:$0x1] %vm60, %v564
    %s566 = sld [smem:[#allocation3 + $0x7f]]
    %s567 = scalar_lea.vmem [#allocation7], %s566
    %v568 = vld [vmem:[%s567] sm:$0x1]
    %569 = vst.msk [vmem:[#allocation2 + $0x7f] sm:$0x1] %vm60, %v568
    %v570 = vld [vmem:[#allocation2] sm:$0xff]
    %v571 = vld [vmem:[#allocation2 + $0x8] sm:$0xff]
    %v572 = vld [vmem:[#allocation2 + $0x10] sm:$0xff]
    %v573 = vld [vmem:[#allocation2 + $0x18] sm:$0xff]
    %v574 = vld [vmem:[#allocation2 + $0x20] sm:$0xff]
    %v575 = vld [vmem:[#allocation2 + $0x28] sm:$0xff]
    %v576 = vld [vmem:[#allocation2 + $0x30] sm:$0xff]
    %v577 = vld [vmem:[#allocation2 + $0x38] sm:$0xff]
    %v578 = vld [vmem:[#allocation2 + $0x40] sm:$0xff]
    %v579 = vld [vmem:[#allocation2 + $0x48] sm:$0xff]
    %v580 = vld [vmem:[#allocation2 + $0x50] sm:$0xff]
    %v581 = vld [vmem:[#allocation2 + $0x58] sm:$0xff]
    %v582 = vld [vmem:[#allocation2 + $0x60] sm:$0xff]
    %v583 = vld [vmem:[#allocation2 + $0x68] sm:$0xff]
    %v584 = vld [vmem:[#allocation2 + $0x70] sm:$0xff]
    %v585 = vld [vmem:[#allocation2 + $0x78] sm:$0xff]
    %v586 = vld [vmem:[#allocation8] sm:$0xff]
    %v587 = vld [vmem:[#allocation8 + $0x8] sm:$0xff]
    %v588 = vld [vmem:[#allocation8 + $0x10] sm:$0xff]
    %v589 = vld [vmem:[#allocation8 + $0x18] sm:$0xff]
    %v590 = vld [vmem:[%s3] sm:$0x1]
    %v592 = vlaneseq
    %v593 = vshrl.u32 %v592, 7
    %v594 = vsub.s32 0, %v593
    %v595 = vrot.slane %v590, %v594
    %vm597 = vcmask 261120
    %v599 = vsel %vm597, %v570, 0
    %v602 = vsel %vm597, %v571, 0
    %v605 = vsel %vm597, %v572, 0
    %v608 = vsel %vm597, %v573, 0
    %v611 = vsel %vm597, %v574, 0
    %v614 = vsel %vm597, %v575, 0
    %v617 = vsel %vm597, %v576, 0
    %v620 = vsel %vm597, %v577, 0
    %v623 = vsel %vm597, %v578, 0
    %v626 = vsel %vm597, %v579, 0
    %v629 = vsel %vm597, %v580, 0
    %v632 = vsel %vm597, %v581, 0
    %v635 = vsel %vm597, %v582, 0
    %v638 = vsel %vm597, %v583, 0
    %v641 = vsel %vm597, %v584, 0
    %v644 = vsel %vm597, %v585, 0
    %646 = vmatprep.subr.mxu0 0.0
    %647 = vmatpush1.msra.mxu0 %v586
    %648 = vmatprep.subr.mxu0 0.0
    %649 = vmatpush1.msra.mxu0 %v587
    %650 = vmatprep.subr.mxu0 0.0
    %651 = vmatpush1.msra.mxu0 %v588
    %652 = vmatprep.subr.mxu0 0.0
    %653 = vmatpush1.msra.mxu0 %v589
    %654 = vmatprep.subr.mxu0 0.0
    %655 = vmatpush1.msra.mxu0 0.0
    %656 = vmatprep.subr.mxu0 0.0
    %657 = vmatpush1.msra.mxu0 0.0
    %658 = vmatprep.subr.mxu0 0.0
    %659 = vmatpush1.msra.mxu0 0.0
    %660 = vmatprep.subr.mxu0 0.0
    %661 = vmatpush1.msra.mxu0 0.0
    %662 = vmatprep.subr.mxu0 0.0
    %663 = vmatpush1.msra.mxu0 0.0
    %664 = vmatprep.subr.mxu0 0.0
    %665 = vmatpush1.msra.mxu0 0.0
    %666 = vmatprep.subr.mxu0 0.0
    %667 = vmatpush1.msra.mxu0 0.0
    %668 = vmatprep.subr.mxu0 0.0
    %669 = vmatpush1.msra.mxu0 0.0
    %670 = vmatprep.subr.mxu0 0.0
    %671 = vmatpush1.msra.mxu0 0.0
    %672 = vmatprep.subr.mxu0 0.0
    %673 = vmatpush1.msra.mxu0 0.0
    %674 = vmatprep.subr.mxu0 0.0
    %675 = vmatpush1.msra.mxu0 0.0
    %676 = vmatprep.subr.mxu0 0.0
    %677 = vmatpush1.msra.mxu0 0.0
    %678 = vmatprep.subr.mxu0 0.0
    %679 = vmatpush1.msra.mxu0 0.0
    %680 = vmatprep.subr.mxu0 0.0
    %681 = vmatpush1.msra.mxu0 0.0
    %682 = vmatprep.subr.mxu0 0.0
    %683 = vmatpush1.msra.mxu0 0.0
    %684 = vmatprep.subr.mxu0 0.0
    %685 = vmatpush1.msra.mxu0 0.0
    %686 = vmatprep.subr.mxu0 0.0
    %687 = vmatpush1.msra.mxu0 0.0
    %688 = vmatprep.subr.mxu0 0.0
    %689 = vmatpush1.msra.mxu0 0.0
    %690 = vmatprep.subr.mxu0 0.0
    %691 = vmatpush1.msra.mxu0 0.0
    %692 = vmatprep.subr.mxu0 0.0
    %693 = vmatpush1.msra.mxu0 0.0
    %694 = vmatprep.subr.mxu0 0.0
    %695 = vmatpush1.msra.mxu0 0.0
    %696 = vmatprep.subr.mxu0 0.0
    %697 = vmatpush1.msra.mxu0 0.0
    %698 = vmatprep.subr.mxu0 0.0
    %699 = vmatpush1.msra.mxu0 0.0
    %700 = vmatprep.subr.mxu0 0.0
    %701 = vmatpush1.msra.mxu0 0.0
    %702 = vmatprep.subr.mxu0 0.0
    %703 = vmatpush1.msra.mxu0 0.0
    %704 = vmatprep.subr.mxu0 0.0
    %705 = vmatpush1.msra.mxu0 0.0
    %706 = vmatprep.subr.mxu0 0.0
    %707 = vmatpush1.msra.mxu0 0.0
    %708 = vmatprep.subr.mxu0 0.0
    %709 = vmatpush1.msra.mxu0 0.0
    %710 = vmatprep.mubr.f32.mxu0 0.0
    %711 = vmatmul.mubr.f32.gmra.mrb[0].mxu0 %v599
    %v712 = vpop.f32.mrb[0].mxu0
    %v713 = vadd.f32 %v595, %v712
    %v714 = vpop.f32.mrb[0].mxu0
    %715 = vmatprep.mubr.f32.mxu0 0.0
    %716 = vmatmul.mubr.f32.gmra.mrb[0].mxu0 %v602
    %v717 = vpop.f32.mrb[0].mxu0
    %v718 = vadd.f32 %v595, %v717
    %v719 = vpop.f32.mrb[0].mxu0
    %720 = vmatprep.mubr.f32.mxu0 0.0
    %721 = vmatmul.mubr.f32.gmra.mrb[0].mxu0 %v605
    %v722 = vpop.f32.mrb[0].mxu0
    %v723 = vadd.f32 %v595, %v722
    %v724 = vpop.f32.mrb[0].mxu0
    %725 = vmatprep.mubr.f32.mxu0 0.0
    %726 = vmatmul.mubr.f32.gmra.mrb[0].mxu0 %v608
    %v727 = vpop.f32.mrb[0].mxu0
    %v728 = vadd.f32 %v595, %v727
    %v729 = vpop.f32.mrb[0].mxu0
    %730 = vmatprep.mubr.f32.mxu0 0.0
    %731 = vmatmul.mubr.f32.gmra.mrb[0].mxu0 %v611
    %v732 = vpop.f32.mrb[0].mxu0
    %v733 = vadd.f32 %v595, %v732
    %v734 = vpop.f32.mrb[0].mxu0
    %735 = vmatprep.mubr.f32.mxu0 0.0
    %736 = vmatmul.mubr.f32.gmra.mrb[0].mxu0 %v614
    %v737 = vpop.f32.mrb[0].mxu0
    %v738 = vadd.f32 %v595, %v737
    %v739 = vpop.f32.mrb[0].mxu0
    %740 = vmatprep.mubr.f32.mxu0 0.0
    %741 = vmatmul.mubr.f32.gmra.mrb[0].mxu0 %v617
    %v742 = vpop.f32.mrb[0].mxu0
    %v743 = vadd.f32 %v595, %v742
    %v744 = vpop.f32.mrb[0].mxu0
    %745 = vmatprep.mubr.f32.mxu0 0.0
    %746 = vmatmul.mubr.f32.gmra.mrb[0].mxu0 %v620
    %v747 = vpop.f32.mrb[0].mxu0
    %v748 = vadd.f32 %v595, %v747
    %v749 = vpop.f32.mrb[0].mxu0
    %750 = vmatprep.mubr.f32.mxu0 0.0
    %751 = vmatmul.mubr.f32.gmra.mrb[0].mxu0 %v623
    %v752 = vpop.f32.mrb[0].mxu0
    %v753 = vadd.f32 %v595, %v752
    %v754 = vpop.f32.mrb[0].mxu0
    %755 = vmatprep.mubr.f32.mxu0 0.0
    %756 = vmatmul.mubr.f32.gmra.mrb[0].mxu0 %v626
    %v757 = vpop.f32.mrb[0].mxu0
    %v758 = vadd.f32 %v595, %v757
    %v759 = vpop.f32.mrb[0].mxu0
    %760 = vmatprep.mubr.f32.mxu0 0.0
    %761 = vmatmul.mubr.f32.gmra.mrb[0].mxu0 %v629
    %v762 = vpop.f32.mrb[0].mxu0
    %v763 = vadd.f32 %v595, %v762
    %v764 = vpop.f32.mrb[0].mxu0
    %765 = vmatprep.mubr.f32.mxu0 0.0
    %766 = vmatmul.mubr.f32.gmra.mrb[0].mxu0 %v632
    %v767 = vpop.f32.mrb[0].mxu0
    %v768 = vadd.f32 %v595, %v767
    %v769 = vpop.f32.mrb[0].mxu0
    %770 = vmatprep.mubr.f32.mxu0 0.0
    %771 = vmatmul.mubr.f32.gmra.mrb[0].mxu0 %v635
    %v772 = vpop.f32.mrb[0].mxu0
    %v773 = vadd.f32 %v595, %v772
    %v774 = vpop.f32.mrb[0].mxu0
    %775 = vmatprep.mubr.f32.mxu0 0.0
    %776 = vmatmul.mubr.f32.gmra.mrb[0].mxu0 %v638
    %v777 = vpop.f32.mrb[0].mxu0
    %v778 = vadd.f32 %v595, %v777
    %v779 = vpop.f32.mrb[0].mxu0
    %780 = vmatprep.mubr.f32.mxu0 0.0
    %781 = vmatmul.mubr.f32.gmra.mrb[0].mxu0 %v641
    %v782 = vpop.f32.mrb[0].mxu0
    %v783 = vadd.f32 %v595, %v782
    %v784 = vpop.f32.mrb[0].mxu0
    %785 = vmatprep.mubr.f32.mxu0 0.0
    %786 = vmatmul.mubr.f32.gmra.mrb[0].mxu0 %v644
    %v787 = vpop.f32.mrb[0].mxu0
    %v788 = vadd.f32 %v595, %v787
    %v789 = vpop.f32.mrb[0].mxu0
    %790 = vdwg.mxu0
    %v791 = vsel %vm597, %v713, -inf
    %v792 = vrot.slane %v791, 4
    %v793 = vmax.f32 %v791, %v792
    %v794 = vrot.slane %v793, 2
    %v795 = vmax.f32 %v793, %v794
    %v796 = vrot.slane %v795, 1
    %v797 = vmax.f32 %v795, %v796
    %v798 = vsel %vm597, %v718, -inf
    %v799 = vrot.slane %v798, 4
    %v800 = vmax.f32 %v798, %v799
    %v801 = vrot.slane %v800, 2
    %v802 = vmax.f32 %v800, %v801
    %v803 = vrot.slane %v802, 1
    %v804 = vmax.f32 %v802, %v803
    %v805 = vsel %vm597, %v723, -inf
    %v806 = vrot.slane %v805, 4
    %v807 = vmax.f32 %v805, %v806
    %v808 = vrot.slane %v807, 2
    %v809 = vmax.f32 %v807, %v808
    %v810 = vrot.slane %v809, 1
    %v811 = vmax.f32 %v809, %v810
    %v812 = vsel %vm597, %v728, -inf
    %v813 = vrot.slane %v812, 4
    %v814 = vmax.f32 %v812, %v813
    %v815 = vrot.slane %v814, 2
    %v816 = vmax.f32 %v814, %v815
    %v817 = vrot.slane %v816, 1
    %v818 = vmax.f32 %v816, %v817
    %v819 = vsel %vm597, %v733, -inf
    %v820 = vrot.slane %v819, 4
    %v821 = vmax.f32 %v819, %v820
    %v822 = vrot.slane %v821, 2
    %v823 = vmax.f32 %v821, %v822
    %v824 = vrot.slane %v823, 1
    %v825 = vmax.f32 %v823, %v824
    %v826 = vsel %vm597, %v738, -inf
    %v827 = vrot.slane %v826, 4
    %v828 = vmax.f32 %v826, %v827
    %v829 = vrot.slane %v828, 2
    %v830 = vmax.f32 %v828, %v829
    %v831 = vrot.slane %v830, 1
    %v832 = vmax.f32 %v830, %v831
    %v833 = vsel %vm597, %v743, -inf
    %v834 = vrot.slane %v833, 4
    %v835 = vmax.f32 %v833, %v834
    %v836 = vrot.slane %v835, 2
    %v837 = vmax.f32 %v835, %v836
    %v838 = vrot.slane %v837, 1
    %v839 = vmax.f32 %v837, %v838
    %v840 = vsel %vm597, %v748, -inf
    %v841 = vrot.slane %v840, 4
    %v842 = vmax.f32 %v840, %v841
    %v843 = vrot.slane %v842, 2
    %v844 = vmax.f32 %v842, %v843
    %v845 = vrot.slane %v844, 1
    %v846 = vmax.f32 %v844, %v845
    %v847 = vsel %vm597, %v753, -inf
    %v848 = vrot.slane %v847, 4
    %v849 = vmax.f32 %v847, %v848
    %v850 = vrot.slane %v849, 2
    %v851 = vmax.f32 %v849, %v850
    %v852 = vrot.slane %v851, 1
    %v853 = vmax.f32 %v851, %v852
    %v854 = vsel %vm597, %v758, -inf
    %v855 = vrot.slane %v854, 4
    %v856 = vmax.f32 %v854, %v855
    %v857 = vrot.slane %v856, 2
    %v858 = vmax.f32 %v856, %v857
    %v859 = vrot.slane %v858, 1
    %v860 = vmax.f32 %v858, %v859
    %v861 = vsel %vm597, %v763, -inf
    %v862 = vrot.slane %v861, 4
    %v863 = vmax.f32 %v861, %v862
    %v864 = vrot.slane %v863, 2
    %v865 = vmax.f32 %v863, %v864
    %v866 = vrot.slane %v865, 1
    %v867 = vmax.f32 %v865, %v866
    %v868 = vsel %vm597, %v768, -inf
    %v869 = vrot.slane %v868, 4
    %v870 = vmax.f32 %v868, %v869
    %v871 = vrot.slane %v870, 2
    %v872 = vmax.f32 %v870, %v871
    %v873 = vrot.slane %v872, 1
    %v874 = vmax.f32 %v872, %v873
    %v875 = vsel %vm597, %v773, -inf
    %v876 = vrot.slane %v875, 4
    %v877 = vmax.f32 %v875, %v876
    %v878 = vrot.slane %v877, 2
    %v879 = vmax.f32 %v877, %v878
    %v880 = vrot.slane %v879, 1
    %v881 = vmax.f32 %v879, %v880
    %v882 = vsel %vm597, %v778, -inf
    %v883 = vrot.slane %v882, 4
    %v884 = vmax.f32 %v882, %v883
    %v885 = vrot.slane %v884, 2
    %v886 = vmax.f32 %v884, %v885
    %v887 = vrot.slane %v886, 1
    %v888 = vmax.f32 %v886, %v887
    %v889 = vsel %vm597, %v783, -inf
    %v890 = vrot.slane %v889, 4
    %v891 = vmax.f32 %v889, %v890
    %v892 = vrot.slane %v891, 2
    %v893 = vmax.f32 %v891, %v892
    %v894 = vrot.slane %v893, 1
    %v895 = vmax.f32 %v893, %v894
    %v896 = vsel %vm597, %v788, -inf
    %v897 = vrot.slane %v896, 4
    %v898 = vmax.f32 %v896, %v897
    %v899 = vrot.slane %v898, 2
    %v900 = vmax.f32 %v898, %v899
    %v901 = vrot.slane %v900, 1
    %v902 = vmax.f32 %v900, %v901
    %vm903 = vcmask 1040384
    %v904 = vsel %vm903, %v797, %v804
    %vm905 = vcmask 1041408
    %v906 = vsel %vm905, %v904, %v811
    %vm907 = vcmask 1042432
    %v908 = vsel %vm907, %v906, %v818
    %vm909 = vcmask 1043456
    %v910 = vsel %vm909, %v908, %v825
    %vm911 = vcmask 1044480
    %v912 = vsel %vm911, %v910, %v832
    %vm913 = vcmask 1045504
    %v914 = vsel %vm913, %v912, %v839
    %vm915 = vcmask 1046528
    %v916 = vsel %vm915, %v914, %v846
    %v917 = vsel %vm903, %v853, %v860
    %v918 = vsel %vm905, %v917, %v867
    %v919 = vsel %vm907, %v918, %v874
    %v920 = vsel %vm909, %v919, %v881
    %v921 = vsel %vm911, %v920, %v888
    %v922 = vsel %vm913, %v921, %v895
    %v923 = vsel %vm915, %v922, %v902
    %v924 = vmul.f32 %v916, %v916
    %vm925 = vcmask 257024
    %v926 = vsel %vm925, %v924, 0.0
    %927 = vadd.xlane.f32.xlu0 %v926
    %v928 = vpop.xlane.xlu0 %927
    %v929 = vmax.f32 %v928, 1e-24
    %v930 = vrsqrt.pop %v929
    %vm931 = vcmask 261124
    %v932 = vsel %vm931, %v924, 0.0
    %933 = vadd.xlane.f32.xlu0 %v932
    %v934 = vpop.xlane.xlu0 %933
    %v935 = vmax.f32 %v934, 1e-24
    %v936 = vrsqrt.pop %v935
    %v937 = vmul.f32 %v923, %v923
    %v938 = vsel %vm925, %v937, 0.0
    %939 = vadd.xlane.f32.xlu0 %v938
    %v940 = vpop.xlane.xlu0 %939
    %v941 = vmax.f32 %v940, 1e-24
    %v942 = vrsqrt.pop %v941
    %v944 = vrot.slane %v916, 4
    %v946 = vmul.f32 %v916, %v944
    %v947 = vsel %vm925, %v946, 0.0
    %948 = vadd.xlane.f32.xlu0 %v947
    %v949 = vpop.xlane.xlu0 %948
    %v951 = vrot.slane %v936, 4
    %v953 = vmul.f32 %v930, %v951
    %v954 = vmul.f32 %v949, %v953
    %v955 = vmul.f32 %v916, %v923
    %v956 = vsel %vm925, %v955, 0.0
    %957 = vadd.xlane.f32.xlu0 %v956
    %v958 = vpop.xlane.xlu0 %957
    %v959 = vmul.f32 %v930, %v942
    %v960 = vmul.f32 %v958, %v959
    %v961 = vsub.f32 %v960, %v954
    %v962 = vadd.f32 %v961, 0.1
    %vm963 = vcmp.gt.f32.partialorder %v962, 0.0
    %v964 = vsel %vm963, 1, 0
    %v965 = vcvt.s32.f32 %v964
    %vm966 = vcmask 3072
    %v967 = vsel %vm966, %v965, 0.0
    %968 = vadd.xlane.f32.xlu0 %v967
    %v969 = vpop.xlane.xlu0 %968
    %v970 = vrot.slane %v969, 4
    %v971 = vadd.f32 %v969, %v970
    %v972 = vrot.slane %v971, 2
    %v973 = vadd.f32 %v971, %v972
    %v974 = vrot.slane %v973, 1
    %v975 = vadd.f32 %v973, %v974
    %s976 = vtos %v975
    %v977 = vsel %vm963, %v962, 0.0
    %v978 = vsel %vm966, %v977, 0.0
    %979 = vadd.xlane.f32.xlu0 %v978
    %v980 = vpop.xlane.xlu0 %979
    %v981 = vrot.slane %v980, 4
    %v982 = vadd.f32 %v980, %v981
    %v983 = vrot.slane %v982, 2
    %v984 = vadd.f32 %v982, %v983
    %v985 = vrot.slane %v984, 1
    %v986 = vadd.f32 %v984, %v985
    %s987 = vtos %v986
    %v988 = vstv %s976
    %v989 = vrcp.pop %v988
    %s990 = vtos %v989
    %s991 = smul.f32 %s987, %s990
    %s992 = scalar_lea.smem [#allocation10], 0
    %993 = sst [smem:[%s992]] %s991
    // Predicated region
    $region30: #{tpu_custom_call.1} parent=1 // pred_check
      _
    $region31: #{tpu_custom_call.1} parent=1 // pred_check_branch
      %995 = sbr.rel (0) target = $region33
    $region32: #{tpu_custom_call.1} parent=1 // pred_region
      %s997 = ssub.s32 16, 16
      %998 = vsyncadd [#allocation6], %s997
      %1001 = dma.smem_to_hbm [#allocation10], 16, %s4, [#allocation6]
    $region33: #{tpu_custom_call.1} parent=1 // pred_fallthru
      _
    // Predicated region
    $region34: #{tpu_custom_call.1} parent=1 // pred_check
      _
    $region35: #{tpu_custom_call.1} parent=1 // pred_check_branch
      %1003 = sbr.rel (0) target = $region37
    $region36: #{tpu_custom_call.1} parent=1 // pred_region
      %1004 = dma.done [#allocation6], 16
    $region37: #{tpu_custom_call.1} parent=1 // pred_fallthru
      _
    %1005 = sfence
    %1006 = vsyncpa [#allocation4], 1
    %1007 = vsyncpa [#allocation9], 1
    %1008 = vsyncpa [#allocation5], 1
    %1009 = vsyncpa [#allocation6], 1

</llo_original>
